<compile_context>
chip_gen: v7x
topology: tpu7x:2x2x1
jax: 0.10.0
libtpu: 0.0.40
codegen_flags: <defaults>
</compile_context>

<pallas_src>
import math
import numpy as np
import jax
import jax.numpy as jnp
from jax.experimental import pallas as pl
from jax.experimental.pallas import tpu as pltpu

# Set to jnp.bfloat16 on v6e/v7x at production sizes (f32 accumulation is kept via
# preferred_element_type). Kept f32 here so the 5e-3 check vs. the f32 reference holds.
MXU_DTYPE = jnp.float32


# ----------------------------------------------------------------------------- glue: squeeze
def squeeze(x, x_mask, n_sqz=2):
    b, c, t = x.shape
    t = (t // n_sqz) * n_sqz
    x = x[:, :, :t]
    x_sqz = x.reshape(b, c, t // n_sqz, n_sqz)
    x_sqz = jnp.transpose(x_sqz, (0, 3, 1, 2)).reshape(b, c * n_sqz, t // n_sqz)
    x_mask = x_mask[:, :, n_sqz - 1::n_sqz]
    return x_sqz * x_mask, x_mask


def unsqueeze(x, x_mask, n_sqz=2):
    b, c, t = x.shape
    x_unsqz = x.reshape(b, n_sqz, c // n_sqz, t)
    x_unsqz = jnp.transpose(x_unsqz, (0, 2, 3, 1)).reshape(b, c // n_sqz, t * n_sqz)
    x_mask = jnp.repeat(x_mask[:, :, :, None], n_sqz, axis=3).reshape(b, 1, t * n_sqz)
    return x_unsqz * x_mask, x_mask


# ----------------------------------------------------------------------------- fused kernel
def _shifted(h, off, T):
    """y[:, t] = h[:, t + off], zero outside [0, T). XLU roll + lane-mask select."""
    if off == 0:
        return h
    rolled = pltpu.roll(h, (-off) % T, 1)
    t_idx = jax.lax.broadcasted_iota(jnp.int32, h.shape, 1)
    valid = jnp.logical_and(t_idx >= -off, t_idx < T - off)
    return jnp.where(valid, rolled, jnp.zeros_like(rolled))


def make_flow_kernel(C, H, K, dilation_rate, L, sigmoid_scale):
    half = C // 2

    def kernel(x_ref, m_ref, mat_ref, cb_ref, ws_ref, bs_ref, wi_ref, bi_ref,
               wr_ref, br_ref, we_ref, be_ref, z_ref, ld_ref):
        f = pl.program_id(1)          # flow-block index ("arbitrary" axis)

        @pl.when(f == 0)
        def _init():
            z_ref[...] = x_ref[...]                       # seed the carry with the input
            ld_ref[...] = jnp.zeros_like(ld_ref)

        m = m_ref[...]                                    # (1, T)
        T = m.shape[-1]

        # ---- ActNorm + InvConvNear fused into one 1x1 matmul (precomposed on host) ----
        xp = z_ref[...]                                   # carry from previous flow block
        x = (jnp.dot(mat_ref[...], xp.astype(MXU_DTYPE),
                     preferred_element_type=jnp.float32) + cb_ref[...]) * m

        x0 = x[:half, :]
        x1 = x[half:, :]

        # ---- CouplingBlock: start 1x1 conv ----
        h = (jnp.dot(ws_ref[...], x0.astype(MXU_DTYPE),
                     preferred_element_type=jnp.float32) + bs_ref[...]) * m

        # ---- WN stack: each dilated conv = ONE wide-contraction matmul over K stacked
        #      shifted copies of h ----
        skip = None
        for i in range(L):
            d = dilation_rate ** i
            pad = (K * d - d) // 2
            h_mx = h.astype(MXU_DTYPE)
            h_stack = jnp.concatenate(
                [_shifted(h_mx, k * d - pad, T) for k in range(K)], axis=0)   # (K*H, T)
            x_in = jnp.dot(wi_ref[i], h_stack,
                           preferred_element_type=jnp.float32) + bi_ref[i]    # (2H, T)
            acts = jnp.tanh(x_in[:H, :]) * jax.nn.sigmoid(x_in[H:, :])
            acts_mx = acts.astype(MXU_DTYPE)
            if i < L - 1:
                rs = jnp.dot(wr_ref[i], acts_mx,
                             preferred_element_type=jnp.float32) + br_ref[i]  # (2H, T)
                h = (h + rs[:H, :]) * m
                s = rs[H:, :]
            else:
                # last WN layer only has a skip path: use the live (H, H) half
                s = jnp.dot(wr_ref[i][H:, :], acts_mx,
                            preferred_element_type=jnp.float32) + br_ref[i][H:, :]
            skip = s if skip is None else skip + s
        wn_out = skip * m

        # ---- end 1x1 conv + affine coupling ----
        o = jnp.dot(we_ref[...], wn_out.astype(MXU_DTYPE),
                    preferred_element_type=jnp.float32) + be_ref[...]
        t_part = o[:half, :]
        s_part = o[half:, :]
        if sigmoid_scale:
            s_part = jnp.log(1e-6 + jax.nn.sigmoid(s_part + 2.0))
        z1 = (t_part + jnp.exp(s_part) * x1) * m

        # Single full-tile, lane-dense store of the new carry. (At this toy C=8 two
        # half-channel stores would be 4-sublane masked stores, so the concat + full
        # write is the denser option.)
        z_ref[...] = jnp.concatenate([x0, z1], axis=0)
        ld_ref[...] = ld_ref[...] + jnp.sum(s_part * m, keepdims=True)

    return kernel


# ----------------------------------------------------------------------------- pallas_call wrapper
def run_flow_blocks(x, m, w, cfg):
    """All n_blocks flow steps fused into ONE pallas_call; activation stays in VMEM."""
    B, C, T = x.shape
    H, K, L = cfg["hidden_channels"], cfg["kernel_size"], cfg["n_layers"]
    nb = cfg["n_blocks"]
    kernel = make_flow_kernel(C, H, K, cfg["dilation_rate"], L, cfg["sigmoid_scale"])

    def wspec(a):       # per-block weight: indexed by the flow-block grid axis
        s = a.shape
        return pl.BlockSpec((None,) + s[1:], lambda b, f: (f,) + (0,) * (len(s) - 1))

    def bspec(s):       # per-batch activation/mask: indexed by the batch grid axis
        return pl.BlockSpec((None,) + s, lambda b, f: (b,) + (0,) * len(s))

    ins = [x, m, w["mat"], w["cbias"], w["w_start"], w["b_start"],
           w["w_in"], w["b_in"], w["w_rs"], w["b_rs"], w["w_end"], w["b_end"]]
    in_specs = [bspec((C, T)), bspec((1, T))] + [wspec(a) for a in ins[2:]]

    # TODO(synk): at production sizes (H~192, long T) add a time-tile grid axis with a
    # (K-1)*dr^(L-1)/2 halo and set vmem_limit_bytes (v7x has only 64 MiB VMEM).
    z, ld = pl.pallas_call(
        kernel,
        grid=(B, nb),
        in_specs=in_specs,
        out_specs=[pl.BlockSpec((None, C, T), lambda b, f: (b, 0, 0)),
                   pl.BlockSpec((None, 1, 1), lambda b, f: (b, 0, 0))],
        out_shape=[jax.ShapeDtypeStruct((B, C, T), jnp.float32),
                   jax.ShapeDtypeStruct((B, 1, 1), jnp.float32)],
        compiler_params=pltpu.CompilerParams(
            dimension_semantics=("parallel", "arbitrary")),
    )(*ins)
    return z, ld[:, 0, 0]


# ----------------------------------------------------------------------------- parameter setup
def invconv_matrix(weight, C, n_split):
    """Precompose InvConvNear's (reshape, permute, 1x1 conv, permute, reshape) into one (C, C) matrix."""
    eye = jnp.eye(C, dtype=jnp.float32)[None]                     # treat columns as "time"
    xr = eye.reshape(1, 2, C // n_split, n_split // 2, C)
    xr = jnp.transpose(xr, (0, 1, 3, 2, 4)).reshape(1, n_split, C // n_split, C)
    z = jnp.einsum("os,bsgt->bogt", weight, xr, precision="highest")
    z = z.reshape(1, 2, n_split // 2, C // n_split, C)
    z = jnp.transpose(z, (0, 1, 3, 2, 4)).reshape(1, C, C)
    return z[0]


def prepare_flow_params(blocks, C, n_split):
    """Host-side: fuse ActNorm into the InvConv matrix, stack conv taps, stack blocks,
    and compute the closed-form (ActNorm + InvConv) logdet coefficient."""
    L, _, H, K = blocks[0]["cp_w_in"].shape  # (L, 2H, H, K)
    mats, cbs = [], []
    ld_coef = jnp.float32(0.0)
    for p in blocks:
        mat = invconv_matrix(p["ic_w"], C, n_split)
        e = jnp.exp(p["an_logs"])[:, 0]
        mats.append(mat * e[None, :])                 # mat @ diag(exp(logs))
        cbs.append(mat @ p["an_bias"])                # mat @ bias
        ld_coef = ld_coef + jnp.sum(p["an_logs"]) \
            + jnp.linalg.slogdet(p["ic_w"])[1] * (C / n_split)
    stack = lambda k: jnp.stack([p[k] for p in blocks], axis=0)
    # (L, 2H, H, K) -> (L, 2H, K*H): K tap weights stacked along the contraction dim.
    w_in = jnp.stack([jnp.transpose(p["cp_w_in"], (0, 1, 3, 2)).reshape(L, 2 * H, K * H)
                      for p in blocks], axis=0)
    w = {
        "mat": jnp.stack(mats, 0).astype(MXU_DTYPE),
        "cbias": jnp.stack(cbs, 0),
        "w_start": stack("cp_w_start").astype(MXU_DTYPE),
        "b_start": stack("cp_b_start"),
        "w_in": w_in.astype(MXU_DTYPE),
        "b_in": stack("cp_b_in"),
        "w_rs": stack("cp_w_rs").astype(MXU_DTYPE),
        "b_rs": stack("cp_b_rs"),
        "w_end": stack("cp_w_end").astype(MXU_DTYPE),
        "b_end": stack("cp_b_end"),
    }
    return w, ld_coef.astype(jnp.float32)


def init_params(key, C, H, K, L, n_blocks, n_split):
    blocks = []
    for _ in range(n_blocks):
        key, *ks = jax.random.split(key, 16)
        p = {}
        # ActNorm (torch inits to zeros; small nonzero values exercise the path)
        p["an_logs"] = 0.1 * jax.random.normal(ks[0], (C, 1), jnp.float32)
        p["an_bias"] = 0.1 * jax.random.normal(ks[1], (C, 1), jnp.float32)
        # InvConvNear: QR-orthogonal init (det > 0), lightly scaled so logdet != 0
        w = jax.random.normal(ks[2], (n_split, n_split), jnp.float32)
        q, _ = jnp.linalg.qr(w)
        q = jnp.where(jnp.linalg.det(q) < 0, q.at[:, 0].set(-q[:, 0]), q)
        p["ic_w"] = 1.05 * q
        half = C // 2
        # CouplingBlock: start conv, WN, end conv
        p["cp_w_start"] = 0.3 * jax.random.normal(ks[3], (H, half), jnp.float32)
        p["cp_b_start"] = 0.1 * jax.random.normal(ks[4], (H, 1), jnp.float32)
        p["cp_w_in"] = 0.15 * jax.random.normal(ks[5], (L, 2 * H, H, K), jnp.float32)
        p["cp_b_in"] = 0.05 * jax.random.normal(ks[6], (L, 2 * H, 1), jnp.float32)
        # res/skip 1x1 convs; last layer is (H, H) in torch -> stored in rows [H:] of a (2H, H) slab
        w_rs = 0.15 * jax.random.normal(ks[7], (L, 2 * H, H), jnp.float32)
        b_rs = 0.05 * jax.random.normal(ks[8], (L, 2 * H, 1), jnp.float32)
        w_rs = w_rs.at[L - 1, :H].set(0.0)
        b_rs = b_rs.at[L - 1, :H].set(0.0)
        p["cp_w_rs"], p["cp_b_rs"] = w_rs, b_rs
        # note: torch zero-inits the end conv; small nonzero values keep the coupling non-trivial
        p["cp_w_end"] = 0.05 * jax.random.normal(ks[9], (C, H), jnp.float32)
        p["cp_b_end"] = 0.02 * jax.random.normal(ks[10], (C, 1), jnp.float32)
        blocks.append(p)
    return blocks


# ----------------------------------------------------------------------------- full forward (Pallas)
def flow_spec_decoder_forward(spect, spect_mask, blocks, cfg):
    """Equivalent of FlowSpecDecoder.forward(spect, spect_mask, reverse=False)."""
    # TODO(synk): reverse=True inverse pass / store_inverse() not implemented (forward only).
    n_sqz = cfg["n_sqz"]
    x, x_mask = squeeze(spect, spect_mask, n_sqz) if n_sqz > 1 else (spect, spect_mask)
    B, C, T = x.shape
    # ActNorm + InvConv logdets are closed-form in params and x_len -> host-side, once.
    x_len = jnp.sum(x_mask, axis=(1, 2))
    w, ld_coef = prepare_flow_params(blocks, C, cfg["n_split"])
    # Lane-dense layout: pad time to a multiple of 128 lanes (mask keeps padding inert).
    T_pad = ((T + 127) // 128) * 128
    x_p = jnp.pad(x, ((0, 0), (0, 0), (0, T_pad - T)))
    m_p = jnp.pad(x_mask, ((0, 0), (0, 0), (0, T_pad - T)))
    z, ld_cpl = run_flow_blocks(x_p, m_p, w, cfg)
    z = z[:, :, :T]
    logdet_tot = ld_coef * x_len + ld_cpl
    if n_sqz > 1:
        z, x_mask = unsqueeze(z, x_mask, n_sqz)
    return z, logdet_tot


# ----------------------------------------------------------------------------- pure-JAX reference
def ref_forward(spect, spect_mask, blocks, cfg):
    x, m = squeeze(spect, spect_mask, cfg["n_sqz"])
    B, C, T = x.shape
    half, H, K, L, dr, ns = C // 2, cfg["hidden_channels"], cfg["kernel_size"], cfg["n_layers"], cfg["dilation_rate"], cfg["n_split"]
    logdet = jnp.zeros((B,), jnp.float32)
    x_len = jnp.sum(m, axis=(1, 2))
    hp_ein = lambda a, b: jnp.einsum("oi,bit->bot", a, b, precision="highest")
    for p in blocks:
        # ActNorm
        x = (p["an_bias"][None] + jnp.exp(p["an_logs"])[None] * x) * m
        logdet = logdet + jnp.sum(p["an_logs"]) * x_len
        # InvConvNear
        xr = x.reshape(B, 2, C // ns, ns // 2, T).transpose(0, 1, 3, 2, 4).reshape(B, ns, C // ns, T)
        z = jnp.einsum("os,bsgt->bogt", p["ic_w"], xr, precision="highest")
        x = z.reshape(B, 2, ns // 2, C // ns, T).transpose(0, 1, 3, 2, 4).reshape(B, C, T) * m
        logdet = logdet + jnp.linalg.slogdet(p["ic_w"])[1] * (C / ns) * x_len
        # CouplingBlock
        x0, x1 = x[:, :half], x[:, half:]
        h = (hp_ein(p["cp_w_start"], x0) + p["cp_b_start"][None]) * m
        skip = jnp.zeros((B, H, T), jnp.float32)
        for i in range(L):
            d = dr ** i
            pad = (K * d - d) // 2
            hp = jnp.pad(h, ((0, 0), (0, 0), (pad, pad)))
            x_in = p["cp_b_in"][i][None]
            for k in range(K):
                x_in = x_in + hp_ein(p["cp_w_in"][i, :, :, k], hp[:, :, k * d:k * d + T])
            acts = jnp.tanh(x_in[:, :H]) * jax.nn.sigmoid(x_in[:, H:])
            rs = hp_ein(p["cp_w_rs"][i], acts) + p["cp_b_rs"][i][None]
            if i < L - 1:
                h = (h + rs[:, :H]) * m
            skip = skip + rs[:, H:]
        wn = skip * m
        o = hp_ein(p["cp_w_end"], wn) + p["cp_b_end"][None]
        t_p, s_p = o[:, :half], o[:, half:]
        z1 = (t_p + jnp.exp(s_p) * x1) * m
        x = jnp.concatenate([x0, z1], axis=1)
        logdet = logdet + jnp.sum(s_p * m, axis=(1, 2))
    x, m = unsqueeze(x, m, cfg["n_sqz"])
    return x, logdet


# ----------------------------------------------------------------------------- main
if __name__ == "__main__":
    key = jax.random.PRNGKey(0)
    B, in_channels, T = 2, 4, 16
    cfg = dict(hidden_channels=16, kernel_size=5, dilation_rate=2,
               n_blocks=2, n_layers=3, n_split=4, n_sqz=2, sigmoid_scale=False)
    C_sq = in_channels * cfg["n_sqz"]

    k_x, k_p = jax.random.split(key)
    spect = jax.random.normal(k_x, (B, in_channels, T), jnp.float32)
    lengths = jnp.array([16, 12], jnp.int32)
    spect_mask = (jnp.arange(T)[None, :] < lengths[:, None]).astype(jnp.float32)[:, None, :]

    blocks = init_params(k_p, C_sq, cfg["hidden_channels"], cfg["kernel_size"],
                         cfg["n_layers"], cfg["n_blocks"], cfg["n_split"])

    z, logdet = flow_spec_decoder_forward(spect, spect_mask, blocks, cfg)
    jax.block_until_ready((z, logdet))

    z_ref, logdet_ref = ref_forward(spect, spect_mask, blocks, cfg)
    assert z.shape == (B, in_channels, T) and logdet.shape == (B,)
    np.testing.assert_allclose(np.asarray(z), np.asarray(z_ref), rtol=5e-3, atol=5e-3)
    np.testing.assert_allclose(np.asarray(logdet), np.asarray(logdet_ref), rtol=5e-3, atol=5e-3)
    print("KERNEL_OK")
</pallas_src>

<mosaic_0001>
module attributes {stable_mosaic.version = 11 : i64} {
  func.func @kernel(%arg0: i32, %arg1: i32, %arg2: memref<1x8x128xf32, #tpu.memory_space<vmem>>, %arg3: memref<1x1x128xf32, #tpu.memory_space<vmem>>, %arg4: memref<1x8x8xf32, #tpu.memory_space<vmem>>, %arg5: memref<1x8x1xf32, #tpu.memory_space<vmem>>, %arg6: memref<1x16x4xf32, #tpu.memory_space<vmem>>, %arg7: memref<1x16x1xf32, #tpu.memory_space<vmem>>, %arg8: memref<1x3x32x80xf32, #tpu.memory_space<vmem>>, %arg9: memref<1x3x32x1xf32, #tpu.memory_space<vmem>>, %arg10: memref<1x3x32x16xf32, #tpu.memory_space<vmem>>, %arg11: memref<1x3x32x1xf32, #tpu.memory_space<vmem>>, %arg12: memref<1x8x16xf32, #tpu.memory_space<vmem>>, %arg13: memref<1x8x1xf32, #tpu.memory_space<vmem>>, %arg14: memref<1x8x128xf32, #tpu.memory_space<vmem>>, %arg15: memref<1x1x1xf32, #tpu.memory_space<vmem>>) attributes {dimension_semantics = [#tpu.dimension_semantics<parallel>, #tpu.dimension_semantics<arbitrary>], iteration_bounds = array<i64: 2, 2>, scalar_prefetch = 0 : i64, scratch_operands = 0 : i64, tpu.core_type = #tpu.core_type<tc>, window_params = [{transform_indices = @transform_0, window_bounds = array<i64: 1, 8, 128>}, {transform_indices = @transform_1, window_bounds = array<i64: 1, 1, 128>}, {transform_indices = @transform_2, window_bounds = array<i64: 1, 8, 8>}, {transform_indices = @transform_3, window_bounds = array<i64: 1, 8, 1>}, {transform_indices = @transform_4, window_bounds = array<i64: 1, 16, 4>}, {transform_indices = @transform_5, window_bounds = array<i64: 1, 16, 1>}, {transform_indices = @transform_6, window_bounds = array<i64: 1, 3, 32, 80>}, {transform_indices = @transform_7, window_bounds = array<i64: 1, 3, 32, 1>}, {transform_indices = @transform_8, window_bounds = array<i64: 1, 3, 32, 16>}, {transform_indices = @transform_9, window_bounds = array<i64: 1, 3, 32, 1>}, {transform_indices = @transform_10, window_bounds = array<i64: 1, 8, 16>}, {transform_indices = @transform_11, window_bounds = array<i64: 1, 8, 1>}, {transform_indices = @transform_12, window_bounds = array<i64: 1, 8, 128>}, {transform_indices = @transform_13, window_bounds = array<i64: 1, 1, 1>}]} {
    %c0_i32 = arith.constant 0 : i32
    %0 = arith.cmpi eq, %arg1, %c0_i32 : i32
    %1 = arith.extui %0 : i1 to i32
    %c0_i32_0 = arith.constant 0 : i32
    %2 = arith.cmpi ne, %1, %c0_i32_0 : i32
    scf.if %2 {
      %c0_123 = arith.constant 0 : index
      %c0_124 = arith.constant 0 : index
      %c0_125 = arith.constant 0 : index
      %254 = vector.load %arg2[%c0_123, %c0_124, %c0_125] : memref<1x8x128xf32, #tpu.memory_space<vmem>>, vector<1x8x128xf32>
      %255 = vector.shape_cast %254 : vector<1x8x128xf32> to vector<8x128xf32>
      %c0_126 = arith.constant 0 : index
      %c0_127 = arith.constant 0 : index
      %c0_128 = arith.constant 0 : index
      %256 = vector.load %arg14[%c0_126, %c0_127, %c0_128] : memref<1x8x128xf32, #tpu.memory_space<vmem>>, vector<1x8x128xf32>
      %257 = vector.shape_cast %256 : vector<1x8x128xf32> to vector<8x128xf32>
      %258 = vector.shape_cast %255 : vector<8x128xf32> to vector<1x8x128xf32>
      tpu.vector_store %arg14[%c0_126, %c0_127, %c0_128], %258 {strides = array<i32>} : memref<1x8x128xf32, #tpu.memory_space<vmem>>, vector<1x8x128xf32>,
      %cst_129 = arith.constant 0.000000e+00 : f32
      %259 = vector.broadcast %cst_129 : f32 to vector<1x1xf32>
      %c0_130 = arith.constant 0 : index
      %c0_131 = arith.constant 0 : index
      %c0_132 = arith.constant 0 : index
      %260 = vector.load %arg15[%c0_130, %c0_131, %c0_132] : memref<1x1x1xf32, #tpu.memory_space<vmem>>, vector<1x1x1xf32>
      %261 = vector.shape_cast %260 : vector<1x1x1xf32> to vector<1x1xf32>
      %262 = vector.shape_cast %259 : vector<1x1xf32> to vector<1x1x1xf32>
      tpu.vector_store %arg15[%c0_130, %c0_131, %c0_132], %262 {strides = array<i32>} : memref<1x1x1xf32, #tpu.memory_space<vmem>>, vector<1x1x1xf32>,
    } else {
    }
    %c0 = arith.constant 0 : index
    %c0_1 = arith.constant 0 : index
    %c0_2 = arith.constant 0 : index
    %3 = vector.load %arg3[%c0, %c0_1, %c0_2] : memref<1x1x128xf32, #tpu.memory_space<vmem>>, vector<1x1x128xf32>
    %4 = vector.shape_cast %3 : vector<1x1x128xf32> to vector<1x128xf32>
    %c0_3 = arith.constant 0 : index
    %c0_4 = arith.constant 0 : index
    %c0_5 = arith.constant 0 : index
    %5 = vector.load %arg14[%c0_3, %c0_4, %c0_5] : memref<1x8x128xf32, #tpu.memory_space<vmem>>, vector<1x8x128xf32>
    %6 = vector.shape_cast %5 : vector<1x8x128xf32> to vector<8x128xf32>
    %c0_6 = arith.constant 0 : index
    %c0_7 = arith.constant 0 : index
    %c0_8 = arith.constant 0 : index
    %7 = vector.load %arg4[%c0_6, %c0_7, %c0_8] : memref<1x8x8xf32, #tpu.memory_space<vmem>>, vector<1x8x8xf32>
    %8 = vector.shape_cast %7 : vector<1x8x8xf32> to vector<8x8xf32>
    %cst = arith.constant dense<0.000000e+00> : vector<8x128xf32>
    %9 = tpu.matmul %8, %6, %cst {dimension_numbers = #tpu.dot_dimension_numbers<[1], [0], [0], [1], [0, 0, 1, 1], [], []>} : vector<8x8xf32>, vector<8x128xf32>, vector<8x128xf32> -> vector<8x128xf32>
    %c0_9 = arith.constant 0 : index
    %c0_10 = arith.constant 0 : index
    %c0_11 = arith.constant 0 : index
    %10 = vector.load %arg5[%c0_9, %c0_10, %c0_11] : memref<1x8x1xf32, #tpu.memory_space<vmem>>, vector<1x8x1xf32>
    %11 = vector.shape_cast %10 : vector<1x8x1xf32> to vector<8x1xf32>
    %12 = vector.broadcast %11 : vector<8x1xf32> to vector<8x128xf32>
    %13 = arith.addf %9, %12 : vector<8x128xf32>
    %14 = vector.broadcast %4 : vector<1x128xf32> to vector<8x128xf32>
    %15 = arith.mulf %13, %14 : vector<8x128xf32>
    %16 = vector.extract_strided_slice %15 {offsets = [0, 0], sizes = [4, 128], strides = [1, 1]} : vector<8x128xf32> to vector<4x128xf32>
    %17 = vector.extract_strided_slice %15 {offsets = [4, 0], sizes = [4, 128], strides = [1, 1]} : vector<8x128xf32> to vector<4x128xf32>
    %c0_12 = arith.constant 0 : index
    %c0_13 = arith.constant 0 : index
    %c0_14 = arith.constant 0 : index
    %18 = vector.load %arg6[%c0_12, %c0_13, %c0_14] : memref<1x16x4xf32, #tpu.memory_space<vmem>>, vector<1x16x4xf32>
    %19 = vector.shape_cast %18 : vector<1x16x4xf32> to vector<16x4xf32>
    %cst_15 = arith.constant dense<0.000000e+00> : vector<16x128xf32>
    %20 = tpu.matmul %19, %16, %cst_15 {dimension_numbers = #tpu.dot_dimension_numbers<[1], [0], [0], [1], [0, 0, 1, 1], [], []>} : vector<16x4xf32>, vector<4x128xf32>, vector<16x128xf32> -> vector<16x128xf32>
    %c0_16 = arith.constant 0 : index
    %c0_17 = arith.constant 0 : index
    %c0_18 = arith.constant 0 : index
    %21 = vector.load %arg7[%c0_16, %c0_17, %c0_18] : memref<1x16x1xf32, #tpu.memory_space<vmem>>, vector<1x16x1xf32>
    %22 = vector.shape_cast %21 : vector<1x16x1xf32> to vector<16x1xf32>
    %23 = vector.broadcast %22 : vector<16x1xf32> to vector<16x128xf32>
    %24 = arith.addf %20, %23 : vector<16x128xf32>
    %25 = vector.broadcast %4 : vector<1x128xf32> to vector<16x128xf32>
    %26 = arith.mulf %24, %25 : vector<16x128xf32>
    %c2_i32 = arith.constant 2 : i32
    %27 = tpu.dynamic_rotate %26 by %c2_i32 dim 1 : vector<16x128xf32>, i32 -> vector<16x128xf32>
    %28 = tpu.iota {dimensions = array<i32: 1>} : vector<16x128xi32>
    %c2_i32_19 = arith.constant 2 : i32
    %29 = vector.broadcast %c2_i32_19 : i32 to vector<16x128xi32>
    %30 = arith.cmpi sge, %28, %29 : vector<16x128xi32>
    %c130_i32 = arith.constant 130 : i32
    %31 = vector.broadcast %c130_i32 : i32 to vector<16x128xi32>
    %32 = arith.cmpi slt, %28, %31 : vector<16x128xi32>
    %33 = arith.andi %30, %32 : vector<16x128xi1>
    %cst_20 = arith.constant 0.000000e+00 : f32
    %34 = vector.broadcast %cst_20 : f32 to vector<16x128xf32>
    %35 = arith.select %33, %27, %34 : vector<16x128xi1>, vector<16x128xf32>
    %c1_i32 = arith.constant 1 : i32
    %36 = tpu.dynamic_rotate %26 by %c1_i32 dim 1 : vector<16x128xf32>, i32 -> vector<16x128xf32>
    %37 = tpu.iota {dimensions = array<i32: 1>} : vector<16x128xi32>
    %c1_i32_21 = arith.constant 1 : i32
    %38 = vector.broadcast %c1_i32_21 : i32 to vector<16x128xi32>
    %39 = arith.cmpi sge, %37, %38 : vector<16x128xi32>
    %c129_i32 = arith.constant 129 : i32
    %40 = vector.broadcast %c129_i32 : i32 to vector<16x128xi32>
    %41 = arith.cmpi slt, %37, %40 : vector<16x128xi32>
    %42 = arith.andi %39, %41 : vector<16x128xi1>
    %cst_22 = arith.constant 0.000000e+00 : f32
    %43 = vector.broadcast %cst_22 : f32 to vector<16x128xf32>
    %44 = arith.select %42, %36, %43 : vector<16x128xi1>, vector<16x128xf32>
    %c127_i32 = arith.constant 127 : i32
    %45 = tpu.dynamic_rotate %26 by %c127_i32 dim 1 : vector<16x128xf32>, i32 -> vector<16x128xf32>
    %46 = tpu.iota {dimensions = array<i32: 1>} : vector<16x128xi32>
    %c-1_i32 = arith.constant -1 : i32
    %47 = vector.broadcast %c-1_i32 : i32 to vector<16x128xi32>
    %48 = arith.cmpi sge, %46, %47 : vector<16x128xi32>
    %c127_i32_23 = arith.constant 127 : i32
    %49 = vector.broadcast %c127_i32_23 : i32 to vector<16x128xi32>
    %50 = arith.cmpi slt, %46, %49 : vector<16x128xi32>
    %51 = arith.andi %48, %50 : vector<16x128xi1>
    %cst_24 = arith.constant 0.000000e+00 : f32
    %52 = vector.broadcast %cst_24 : f32 to vector<16x128xf32>
    %53 = arith.select %51, %45, %52 : vector<16x128xi1>, vector<16x128xf32>
    %c126_i32 = arith.constant 126 : i32
    %54 = tpu.dynamic_rotate %26 by %c126_i32 dim 1 : vector<16x128xf32>, i32 -> vector<16x128xf32>
    %55 = tpu.iota {dimensions = array<i32: 1>} : vector<16x128xi32>
    %c-2_i32 = arith.constant -2 : i32
    %56 = vector.broadcast %c-2_i32 : i32 to vector<16x128xi32>
    %57 = arith.cmpi sge, %55, %56 : vector<16x128xi32>
    %c126_i32_25 = arith.constant 126 : i32
    %58 = vector.broadcast %c126_i32_25 : i32 to vector<16x128xi32>
    %59 = arith.cmpi slt, %55, %58 : vector<16x128xi32>
    %60 = arith.andi %57, %59 : vector<16x128xi1>
    %cst_26 = arith.constant 0.000000e+00 : f32
    %61 = vector.broadcast %cst_26 : f32 to vector<16x128xf32>
    %62 = arith.select %60, %54, %61 : vector<16x128xi1>, vector<16x128xf32>
    %63 = tpu.concatenate %35, %44, %26, %53, %62 in 0 : vector<16x128xf32>, vector<16x128xf32>, vector<16x128xf32>, vector<16x128xf32>, vector<16x128xf32> -> vector<80x128xf32>
    %c0_27 = arith.constant 0 : index
    %c0_28 = arith.constant 0 : index
    %c0_29 = arith.constant 0 : index
    %c0_30 = arith.constant 0 : index
    %64 = vector.load %arg8[%c0_27, %c0_28, %c0_29, %c0_30] : memref<1x3x32x80xf32, #tpu.memory_space<vmem>>, vector<1x1x32x80xf32>
    %65 = vector.shape_cast %64 : vector<1x1x32x80xf32> to vector<32x80xf32>
    %cst_31 = arith.constant dense<0.000000e+00> : vector<32x128xf32>
    %66 = tpu.matmul %65, %63, %cst_31 {dimension_numbers = #tpu.dot_dimension_numbers<[1], [0], [0], [1], [0, 0, 1, 1], [], []>} : vector<32x80xf32>, vector<80x128xf32>, vector<32x128xf32> -> vector<32x128xf32>
    %c0_32 = arith.constant 0 : index
    %c0_33 = arith.constant 0 : index
    %c0_34 = arith.constant 0 : index
    %c0_35 = arith.constant 0 : index
    %67 = vector.load %arg9[%c0_32, %c0_33, %c0_34, %c0_35] : memref<1x3x32x1xf32, #tpu.memory_space<vmem>>, vector<1x1x32x1xf32>
    %68 = vector.shape_cast %67 : vector<1x1x32x1xf32> to vector<32x1xf32>
    %69 = vector.broadcast %68 : vector<32x1xf32> to vector<32x128xf32>
    %70 = arith.addf %66, %69 : vector<32x128xf32>
    %71 = vector.extract_strided_slice %70 {offsets = [0, 0], sizes = [16, 128], strides = [1, 1]} : vector<32x128xf32> to vector<16x128xf32>
    %72 = math.tanh %71 : vector<16x128xf32>
    %73 = vector.extract_strided_slice %70 {offsets = [16, 0], sizes = [16, 128], strides = [1, 1]} : vector<32x128xf32> to vector<16x128xf32>
    %74 = arith.negf %73 : vector<16x128xf32>
    %75 = math.exp %74 : vector<16x128xf32>
    %cst_36 = arith.constant 1.000000e+00 : f32
    %76 = vector.broadcast %cst_36 : f32 to vector<16x128xf32>
    %77 = arith.addf %76, %75 : vector<16x128xf32>
    %78 = arith.divf %76, %77 : vector<16x128xf32>
    %79 = arith.mulf %72, %78 : vector<16x128xf32>
    %c0_37 = arith.constant 0 : index
    %c0_38 = arith.constant 0 : index
    %c0_39 = arith.constant 0 : index
    %c0_40 = arith.constant 0 : index
    %80 = vector.load %arg10[%c0_37, %c0_38, %c0_39, %c0_40] : memref<1x3x32x16xf32, #tpu.memory_space<vmem>>, vector<1x1x32x16xf32>
    %81 = vector.shape_cast %80 : vector<1x1x32x16xf32> to vector<32x16xf32>
    %cst_41 = arith.constant dense<0.000000e+00> : vector<32x128xf32>
    %82 = tpu.matmul %81, %79, %cst_41 {dimension_numbers = #tpu.dot_dimension_numbers<[1], [0], [0], [1], [0, 0, 1, 1], [], []>} : vector<32x16xf32>, vector<16x128xf32>, vector<32x128xf32> -> vector<32x128xf32>
    %c0_42 = arith.constant 0 : index
    %c0_43 = arith.constant 0 : index
    %c0_44 = arith.constant 0 : index
    %c0_45 = arith.constant 0 : index
    %83 = vector.load %arg11[%c0_42, %c0_43, %c0_44, %c0_45] : memref<1x3x32x1xf32, #tpu.memory_space<vmem>>, vector<1x1x32x1xf32>
    %84 = vector.shape_cast %83 : vector<1x1x32x1xf32> to vector<32x1xf32>
    %85 = vector.broadcast %84 : vector<32x1xf32> to vector<32x128xf32>
    %86 = arith.addf %82, %85 : vector<32x128xf32>
    %87 = vector.extract_strided_slice %86 {offsets = [0, 0], sizes = [16, 128], strides = [1, 1]} : vector<32x128xf32> to vector<16x128xf32>
    %88 = arith.addf %26, %87 : vector<16x128xf32>
    %89 = vector.broadcast %4 : vector<1x128xf32> to vector<16x128xf32>
    %90 = arith.mulf %88, %89 : vector<16x128xf32>
    %91 = vector.extract_strided_slice %86 {offsets = [16, 0], sizes = [16, 128], strides = [1, 1]} : vector<32x128xf32> to vector<16x128xf32>
    %c4_i32 = arith.constant 4 : i32
    %92 = tpu.dynamic_rotate %90 by %c4_i32 dim 1 : vector<16x128xf32>, i32 -> vector<16x128xf32>
    %93 = tpu.iota {dimensions = array<i32: 1>} : vector<16x128xi32>
    %c4_i32_46 = arith.constant 4 : i32
    %94 = vector.broadcast %c4_i32_46 : i32 to vector<16x128xi32>
    %95 = arith.cmpi sge, %93, %94 : vector<16x128xi32>
    %c132_i32 = arith.constant 132 : i32
    %96 = vector.broadcast %c132_i32 : i32 to vector<16x128xi32>
    %97 = arith.cmpi slt, %93, %96 : vector<16x128xi32>
    %98 = arith.andi %95, %97 : vector<16x128xi1>
    %cst_47 = arith.constant 0.000000e+00 : f32
    %99 = vector.broadcast %cst_47 : f32 to vector<16x128xf32>
    %100 = arith.select %98, %92, %99 : vector<16x128xi1>, vector<16x128xf32>
    %c2_i32_48 = arith.constant 2 : i32
    %101 = tpu.dynamic_rotate %90 by %c2_i32_48 dim 1 : vector<16x128xf32>, i32 -> vector<16x128xf32>
    %102 = tpu.iota {dimensions = array<i32: 1>} : vector<16x128xi32>
    %c2_i32_49 = arith.constant 2 : i32
    %103 = vector.broadcast %c2_i32_49 : i32 to vector<16x128xi32>
    %104 = arith.cmpi sge, %102, %103 : vector<16x128xi32>
    %c130_i32_50 = arith.constant 130 : i32
    %105 = vector.broadcast %c130_i32_50 : i32 to vector<16x128xi32>
    %106 = arith.cmpi slt, %102, %105 : vector<16x128xi32>
    %107 = arith.andi %104, %106 : vector<16x128xi1>
    %cst_51 = arith.constant 0.000000e+00 : f32
    %108 = vector.broadcast %cst_51 : f32 to vector<16x128xf32>
    %109 = arith.select %107, %101, %108 : vector<16x128xi1>, vector<16x128xf32>
    %c126_i32_52 = arith.constant 126 : i32
    %110 = tpu.dynamic_rotate %90 by %c126_i32_52 dim 1 : vector<16x128xf32>, i32 -> vector<16x128xf32>
    %111 = tpu.iota {dimensions = array<i32: 1>} : vector<16x128xi32>
    %c-2_i32_53 = arith.constant -2 : i32
    %112 = vector.broadcast %c-2_i32_53 : i32 to vector<16x128xi32>
    %113 = arith.cmpi sge, %111, %112 : vector<16x128xi32>
    %c126_i32_54 = arith.constant 126 : i32
    %114 = vector.broadcast %c126_i32_54 : i32 to vector<16x128xi32>
    %115 = arith.cmpi slt, %111, %114 : vector<16x128xi32>
    %116 = arith.andi %113, %115 : vector<16x128xi1>
    %cst_55 = arith.constant 0.000000e+00 : f32
    %117 = vector.broadcast %cst_55 : f32 to vector<16x128xf32>
    %118 = arith.select %116, %110, %117 : vector<16x128xi1>, vector<16x128xf32>
    %c124_i32 = arith.constant 124 : i32
    %119 = tpu.dynamic_rotate %90 by %c124_i32 dim 1 : vector<16x128xf32>, i32 -> vector<16x128xf32>
    %120 = tpu.iota {dimensions = array<i32: 1>} : vector<16x128xi32>
    %c-4_i32 = arith.constant -4 : i32
    %121 = vector.broadcast %c-4_i32 : i32 to vector<16x128xi32>
    %122 = arith.cmpi sge, %120, %121 : vector<16x128xi32>
    %c124_i32_56 = arith.constant 124 : i32
    %123 = vector.broadcast %c124_i32_56 : i32 to vector<16x128xi32>
    %124 = arith.cmpi slt, %120, %123 : vector<16x128xi32>
    %125 = arith.andi %122, %124 : vector<16x128xi1>
    %cst_57 = arith.constant 0.000000e+00 : f32
    %126 = vector.broadcast %cst_57 : f32 to vector<16x128xf32>
    %127 = arith.select %125, %119, %126 : vector<16x128xi1>, vector<16x128xf32>
    %128 = tpu.concatenate %100, %109, %90, %118, %127 in 0 : vector<16x128xf32>, vector<16x128xf32>, vector<16x128xf32>, vector<16x128xf32>, vector<16x128xf32> -> vector<80x128xf32>
    %c0_58 = arith.constant 0 : index
    %c1 = arith.constant 1 : index
    %c0_59 = arith.constant 0 : index
    %c0_60 = arith.constant 0 : index
    %129 = vector.load %arg8[%c0_58, %c1, %c0_59, %c0_60] : memref<1x3x32x80xf32, #tpu.memory_space<vmem>>, vector<1x1x32x80xf32>
    %130 = vector.shape_cast %129 : vector<1x1x32x80xf32> to vector<32x80xf32>
    %cst_61 = arith.constant dense<0.000000e+00> : vector<32x128xf32>
    %131 = tpu.matmul %130, %128, %cst_61 {dimension_numbers = #tpu.dot_dimension_numbers<[1], [0], [0], [1], [0, 0, 1, 1], [], []>} : vector<32x80xf32>, vector<80x128xf32>, vector<32x128xf32> -> vector<32x128xf32>
    %c0_62 = arith.constant 0 : index
    %c1_63 = arith.constant 1 : index
    %c0_64 = arith.constant 0 : index
    %c0_65 = arith.constant 0 : index
    %132 = vector.load %arg9[%c0_62, %c1_63, %c0_64, %c0_65] : memref<1x3x32x1xf32, #tpu.memory_space<vmem>>, vector<1x1x32x1xf32>
    %133 = vector.shape_cast %132 : vector<1x1x32x1xf32> to vector<32x1xf32>
    %134 = vector.broadcast %133 : vector<32x1xf32> to vector<32x128xf32>
    %135 = arith.addf %131, %134 : vector<32x128xf32>
    %136 = vector.extract_strided_slice %135 {offsets = [0, 0], sizes = [16, 128], strides = [1, 1]} : vector<32x128xf32> to vector<16x128xf32>
    %137 = math.tanh %136 : vector<16x128xf32>
    %138 = vector.extract_strided_slice %135 {offsets = [16, 0], sizes = [16, 128], strides = [1, 1]} : vector<32x128xf32> to vector<16x128xf32>
    %139 = arith.negf %138 : vector<16x128xf32>
    %140 = math.exp %139 : vector<16x128xf32>
    %cst_66 = arith.constant 1.000000e+00 : f32
    %141 = vector.broadcast %cst_66 : f32 to vector<16x128xf32>
    %142 = arith.addf %141, %140 : vector<16x128xf32>
    %143 = arith.divf %141, %142 : vector<16x128xf32>
    %144 = arith.mulf %137, %143 : vector<16x128xf32>
    %c0_67 = arith.constant 0 : index
    %c1_68 = arith.constant 1 : index
    %c0_69 = arith.constant 0 : index
    %c0_70 = arith.constant 0 : index
    %145 = vector.load %arg10[%c0_67, %c1_68, %c0_69, %c0_70] : memref<1x3x32x16xf32, #tpu.memory_space<vmem>>, vector<1x1x32x16xf32>
    %146 = vector.shape_cast %145 : vector<1x1x32x16xf32> to vector<32x16xf32>
    %cst_71 = arith.constant dense<0.000000e+00> : vector<32x128xf32>
    %147 = tpu.matmul %146, %144, %cst_71 {dimension_numbers = #tpu.dot_dimension_numbers<[1], [0], [0], [1], [0, 0, 1, 1], [], []>} : vector<32x16xf32>, vector<16x128xf32>, vector<32x128xf32> -> vector<32x128xf32>
    %c0_72 = arith.constant 0 : index
    %c1_73 = arith.constant 1 : index
    %c0_74 = arith.constant 0 : index
    %c0_75 = arith.constant 0 : index
    %148 = vector.load %arg11[%c0_72, %c1_73, %c0_74, %c0_75] : memref<1x3x32x1xf32, #tpu.memory_space<vmem>>, vector<1x1x32x1xf32>
    %149 = vector.shape_cast %148 : vector<1x1x32x1xf32> to vector<32x1xf32>
    %150 = vector.broadcast %149 : vector<32x1xf32> to vector<32x128xf32>
    %151 = arith.addf %147, %150 : vector<32x128xf32>
    %152 = vector.extract_strided_slice %151 {offsets = [0, 0], sizes = [16, 128], strides = [1, 1]} : vector<32x128xf32> to vector<16x128xf32>
    %153 = arith.addf %90, %152 : vector<16x128xf32>
    %154 = vector.broadcast %4 : vector<1x128xf32> to vector<16x128xf32>
    %155 = arith.mulf %153, %154 : vector<16x128xf32>
    %156 = vector.extract_strided_slice %151 {offsets = [16, 0], sizes = [16, 128], strides = [1, 1]} : vector<32x128xf32> to vector<16x128xf32>
    %157 = arith.addf %91, %156 : vector<16x128xf32>
    %c8_i32 = arith.constant 8 : i32
    %158 = tpu.dynamic_rotate %155 by %c8_i32 dim 1 : vector<16x128xf32>, i32 -> vector<16x128xf32>
    %159 = tpu.iota {dimensions = array<i32: 1>} : vector<16x128xi32>
    %c8_i32_76 = arith.constant 8 : i32
    %160 = vector.broadcast %c8_i32_76 : i32 to vector<16x128xi32>
    %161 = arith.cmpi sge, %159, %160 : vector<16x128xi32>
    %c136_i32 = arith.constant 136 : i32
    %162 = vector.broadcast %c136_i32 : i32 to vector<16x128xi32>
    %163 = arith.cmpi slt, %159, %162 : vector<16x128xi32>
    %164 = arith.andi %161, %163 : vector<16x128xi1>
    %cst_77 = arith.constant 0.000000e+00 : f32
    %165 = vector.broadcast %cst_77 : f32 to vector<16x128xf32>
    %166 = arith.select %164, %158, %165 : vector<16x128xi1>, vector<16x128xf32>
    %c4_i32_78 = arith.constant 4 : i32
    %167 = tpu.dynamic_rotate %155 by %c4_i32_78 dim 1 : vector<16x128xf32>, i32 -> vector<16x128xf32>
    %168 = tpu.iota {dimensions = array<i32: 1>} : vector<16x128xi32>
    %c4_i32_79 = arith.constant 4 : i32
    %169 = vector.broadcast %c4_i32_79 : i32 to vector<16x128xi32>
    %170 = arith.cmpi sge, %168, %169 : vector<16x128xi32>
    %c132_i32_80 = arith.constant 132 : i32
    %171 = vector.broadcast %c132_i32_80 : i32 to vector<16x128xi32>
    %172 = arith.cmpi slt, %168, %171 : vector<16x128xi32>
    %173 = arith.andi %170, %172 : vector<16x128xi1>
    %cst_81 = arith.constant 0.000000e+00 : f32
    %174 = vector.broadcast %cst_81 : f32 to vector<16x128xf32>
    %175 = arith.select %173, %167, %174 : vector<16x128xi1>, vector<16x128xf32>
    %c124_i32_82 = arith.constant 124 : i32
    %176 = tpu.dynamic_rotate %155 by %c124_i32_82 dim 1 : vector<16x128xf32>, i32 -> vector<16x128xf32>
    %177 = tpu.iota {dimensions = array<i32: 1>} : vector<16x128xi32>
    %c-4_i32_83 = arith.constant -4 : i32
    %178 = vector.broadcast %c-4_i32_83 : i32 to vector<16x128xi32>
    %179 = arith.cmpi sge, %177, %178 : vector<16x128xi32>
    %c124_i32_84 = arith.constant 124 : i32
    %180 = vector.broadcast %c124_i32_84 : i32 to vector<16x128xi32>
    %181 = arith.cmpi slt, %177, %180 : vector<16x128xi32>
    %182 = arith.andi %179, %181 : vector<16x128xi1>
    %cst_85 = arith.constant 0.000000e+00 : f32
    %183 = vector.broadcast %cst_85 : f32 to vector<16x128xf32>
    %184 = arith.select %182, %176, %183 : vector<16x128xi1>, vector<16x128xf32>
    %c120_i32 = arith.constant 120 : i32
    %185 = tpu.dynamic_rotate %155 by %c120_i32 dim 1 : vector<16x128xf32>, i32 -> vector<16x128xf32>
    %186 = tpu.iota {dimensions = array<i32: 1>} : vector<16x128xi32>
    %c-8_i32 = arith.constant -8 : i32
    %187 = vector.broadcast %c-8_i32 : i32 to vector<16x128xi32>
    %188 = arith.cmpi sge, %186, %187 : vector<16x128xi32>
    %c120_i32_86 = arith.constant 120 : i32
    %189 = vector.broadcast %c120_i32_86 : i32 to vector<16x128xi32>
    %190 = arith.cmpi slt, %186, %189 : vector<16x128xi32>
    %191 = arith.andi %188, %190 : vector<16x128xi1>
    %cst_87 = arith.constant 0.000000e+00 : f32
    %192 = vector.broadcast %cst_87 : f32 to vector<16x128xf32>
    %193 = arith.select %191, %185, %192 : vector<16x128xi1>, vector<16x128xf32>
    %194 = tpu.concatenate %166, %175, %155, %184, %193 in 0 : vector<16x128xf32>, vector<16x128xf32>, vector<16x128xf32>, vector<16x128xf32>, vector<16x128xf32> -> vector<80x128xf32>
    %c0_88 = arith.constant 0 : index
    %c2 = arith.constant 2 : index
    %c0_89 = arith.constant 0 : index
    %c0_90 = arith.constant 0 : index
    %195 = vector.load %arg8[%c0_88, %c2, %c0_89, %c0_90] : memref<1x3x32x80xf32, #tpu.memory_space<vmem>>, vector<1x1x32x80xf32>
    %196 = vector.shape_cast %195 : vector<1x1x32x80xf32> to vector<32x80xf32>
    %cst_91 = arith.constant dense<0.000000e+00> : vector<32x128xf32>
    %197 = tpu.matmul %196, %194, %cst_91 {dimension_numbers = #tpu.dot_dimension_numbers<[1], [0], [0], [1], [0, 0, 1, 1], [], []>} : vector<32x80xf32>, vector<80x128xf32>, vector<32x128xf32> -> vector<32x128xf32>
    %c0_92 = arith.constant 0 : index
    %c2_93 = arith.constant 2 : index
    %c0_94 = arith.constant 0 : index
    %c0_95 = arith.constant 0 : index
    %198 = vector.load %arg9[%c0_92, %c2_93, %c0_94, %c0_95] : memref<1x3x32x1xf32, #tpu.memory_space<vmem>>, vector<1x1x32x1xf32>
    %199 = vector.shape_cast %198 : vector<1x1x32x1xf32> to vector<32x1xf32>
    %200 = vector.broadcast %199 : vector<32x1xf32> to vector<32x128xf32>
    %201 = arith.addf %197, %200 : vector<32x128xf32>
    %202 = vector.extract_strided_slice %201 {offsets = [0, 0], sizes = [16, 128], strides = [1, 1]} : vector<32x128xf32> to vector<16x128xf32>
    %203 = math.tanh %202 : vector<16x128xf32>
    %204 = vector.extract_strided_slice %201 {offsets = [16, 0], sizes = [16, 128], strides = [1, 1]} : vector<32x128xf32> to vector<16x128xf32>
    %205 = arith.negf %204 : vector<16x128xf32>
    %206 = math.exp %205 : vector<16x128xf32>
    %cst_96 = arith.constant 1.000000e+00 : f32
    %207 = vector.broadcast %cst_96 : f32 to vector<16x128xf32>
    %208 = arith.addf %207, %206 : vector<16x128xf32>
    %209 = arith.divf %207, %208 : vector<16x128xf32>
    %210 = arith.mulf %203, %209 : vector<16x128xf32>
    %c0_97 = arith.constant 0 : index
    %c2_98 = arith.constant 2 : index
    %c0_99 = arith.constant 0 : index
    %c0_100 = arith.constant 0 : index
    %211 = vector.load %arg10[%c0_97, %c2_98, %c0_99, %c0_100] : memref<1x3x32x16xf32, #tpu.memory_space<vmem>>, vector<1x1x32x16xf32>
    %212 = vector.shape_cast %211 : vector<1x1x32x16xf32> to vector<32x16xf32>
    %213 = vector.extract_strided_slice %212 {offsets = [16, 0], sizes = [16, 16], strides = [1, 1]} : vector<32x16xf32> to vector<16x16xf32>
    %cst_101 = arith.constant dense<0.000000e+00> : vector<16x128xf32>
    %214 = tpu.matmul %213, %210, %cst_101 {dimension_numbers = #tpu.dot_dimension_numbers<[1], [0], [0], [1], [0, 0, 1, 1], [], []>} : vector<16x16xf32>, vector<16x128xf32>, vector<16x128xf32> -> vector<16x128xf32>
    %c0_102 = arith.constant 0 : index
    %c2_103 = arith.constant 2 : index
    %c0_104 = arith.constant 0 : index
    %c0_105 = arith.constant 0 : index
    %215 = vector.load %arg11[%c0_102, %c2_103, %c0_104, %c0_105] : memref<1x3x32x1xf32, #tpu.memory_space<vmem>>, vector<1x1x32x1xf32>
    %216 = vector.shape_cast %215 : vector<1x1x32x1xf32> to vector<32x1xf32>
    %217 = vector.extract_strided_slice %216 {offsets = [16, 0], sizes = [16, 1], strides = [1, 1]} : vector<32x1xf32> to vector<16x1xf32>
    %218 = vector.broadcast %217 : vector<16x1xf32> to vector<16x128xf32>
    %219 = arith.addf %214, %218 : vector<16x128xf32>
    %220 = arith.addf %157, %219 : vector<16x128xf32>
    %221 = vector.broadcast %4 : vector<1x128xf32> to vector<16x128xf32>
    %222 = arith.mulf %220, %221 : vector<16x128xf32>
    %c0_106 = arith.constant 0 : index
    %c0_107 = arith.constant 0 : index
    %c0_108 = arith.constant 0 : index
    %223 = vector.load %arg12[%c0_106, %c0_107, %c0_108] : memref<1x8x16xf32, #tpu.memory_space<vmem>>, vector<1x8x16xf32>
    %224 = vector.shape_cast %223 : vector<1x8x16xf32> to vector<8x16xf32>
    %cst_109 = arith.constant dense<0.000000e+00> : vector<8x128xf32>
    %225 = tpu.matmul %224, %222, %cst_109 {dimension_numbers = #tpu.dot_dimension_numbers<[1], [0], [0], [1], [0, 0, 1, 1], [], []>} : vector<8x16xf32>, vector<16x128xf32>, vector<8x128xf32> -> vector<8x128xf32>
    %c0_110 = arith.constant 0 : index
    %c0_111 = arith.constant 0 : index
    %c0_112 = arith.constant 0 : index
    %226 = vector.load %arg13[%c0_110, %c0_111, %c0_112] : memref<1x8x1xf32, #tpu.memory_space<vmem>>, vector<1x8x1xf32>
    %227 = vector.shape_cast %226 : vector<1x8x1xf32> to vector<8x1xf32>
    %228 = vector.broadcast %227 : vector<8x1xf32> to vector<8x128xf32>
    %229 = arith.addf %225, %228 : vector<8x128xf32>
    %230 = vector.extract_strided_slice %229 {offsets = [0, 0], sizes = [4, 128], strides = [1, 1]} : vector<8x128xf32> to vector<4x128xf32>
    %231 = vector.extract_strided_slice %229 {offsets = [4, 0], sizes = [4, 128], strides = [1, 1]} : vector<8x128xf32> to vector<4x128xf32>
    %232 = math.exp %231 : vector<4x128xf32>
    %233 = arith.mulf %232, %17 : vector<4x128xf32>
    %234 = arith.addf %230, %233 : vector<4x128xf32>
    %235 = vector.broadcast %4 : vector<1x128xf32> to vector<4x128xf32>
    %236 = arith.mulf %234, %235 : vector<4x128xf32>
    %237 = tpu.concatenate %16, %236 in 0 : vector<4x128xf32>, vector<4x128xf32> -> vector<8x128xf32>
    %c0_113 = arith.constant 0 : index
    %c0_114 = arith.constant 0 : index
    %c0_115 = arith.constant 0 : index
    %238 = vector.load %arg14[%c0_113, %c0_114, %c0_115] : memref<1x8x128xf32, #tpu.memory_space<vmem>>, vector<1x8x128xf32>
    %239 = vector.shape_cast %238 : vector<1x8x128xf32> to vector<8x128xf32>
    %240 = vector.shape_cast %237 : vector<8x128xf32> to vector<1x8x128xf32>
    tpu.vector_store %arg14[%c0_113, %c0_114, %c0_115], %240 {strides = array<i32>} : memref<1x8x128xf32, #tpu.memory_space<vmem>>, vector<1x8x128xf32>,
    %c0_116 = arith.constant 0 : index
    %c0_117 = arith.constant 0 : index
    %c0_118 = arith.constant 0 : index
    %241 = vector.load %arg15[%c0_116, %c0_117, %c0_118] : memref<1x1x1xf32, #tpu.memory_space<vmem>>, vector<1x1x1xf32>
    %242 = vector.shape_cast %241 : vector<1x1x1xf32> to vector<1x1xf32>
    %243 = vector.broadcast %4 : vector<1x128xf32> to vector<4x128xf32>
    %244 = arith.mulf %231, %243 : vector<4x128xf32>
    %245 = vector.shape_cast %244 : vector<4x128xf32> to vector<1x4x128xf32>
    %cst_119 = arith.constant dense<0.000000e+00> : vector<1xf32>
    %246 = vector.multi_reduction <add>, %245, %cst_119 [1, 2] : vector<1x4x128xf32> to vector<1xf32>
    %247 = vector.shape_cast %246 : vector<1xf32> to vector<1x1x1xf32>
    %248 = vector.extract %247[0, 0, 0] : f32 from vector<1x1x1xf32>
    %249 = vector.broadcast %248 : f32 to vector<1x1xf32>
    %250 = arith.addf %242, %249 : vector<1x1xf32>
    %c0_120 = arith.constant 0 : index
    %c0_121 = arith.constant 0 : index
    %c0_122 = arith.constant 0 : index
    %251 = vector.load %arg15[%c0_120, %c0_121, %c0_122] : memref<1x1x1xf32, #tpu.memory_space<vmem>>, vector<1x1x1xf32>
    %252 = vector.shape_cast %251 : vector<1x1x1xf32> to vector<1x1xf32>
    %253 = vector.shape_cast %250 : vector<1x1xf32> to vector<1x1x1xf32>
    tpu.vector_store %arg15[%c0_120, %c0_121, %c0_122], %253 {strides = array<i32>} : memref<1x1x1xf32, #tpu.memory_space<vmem>>, vector<1x1x1xf32>,
    return
  }
  func.func @transform_0(%arg0: i32, %arg1: i32) -> (i32, i32, i32) {
    %c0_i32 = arith.constant 0 : i32
    %c0_i32_0 = arith.constant 0 : i32
    %c0_i32_1 = arith.constant 0 : i32
    return %arg0, %c0_i32, %c0_i32_0 : i32, i32, i32
  }
  func.func @transform_1(%arg0: i32, %arg1: i32) -> (i32, i32, i32) {
    %c0_i32 = arith.constant 0 : i32
    %c0_i32_0 = arith.constant 0 : i32
    %c0_i32_1 = arith.constant 0 : i32
    return %arg0, %c0_i32, %c0_i32_0 : i32, i32, i32
  }
  func.func @transform_2(%arg0: i32, %arg1: i32) -> (i32, i32, i32) {
    %c0_i32 = arith.constant 0 : i32
    %c0_i32_0 = arith.constant 0 : i32
    %c0_i32_1 = arith.constant 0 : i32
    return %arg1, %c0_i32, %c0_i32_0 : i32, i32, i32
  }
  func.func @transform_3(%arg0: i32, %arg1: i32) -> (i32, i32, i32) {
    %c0_i32 = arith.constant 0 : i32
    %c0_i32_0 = arith.constant 0 : i32
    %c0_i32_1 = arith.constant 0 : i32
    return %arg1, %c0_i32, %c0_i32_0 : i32, i32, i32
  }
  func.func @transform_4(%arg0: i32, %arg1: i32) -> (i32, i32, i32) {
    %c0_i32 = arith.constant 0 : i32
    %c0_i32_0 = arith.constant 0 : i32
    %c0_i32_1 = arith.constant 0 : i32
    return %arg1, %c0_i32, %c0_i32_0 : i32, i32, i32
  }
  func.func @transform_5(%arg0: i32, %arg1: i32) -> (i32, i32, i32) {
    %c0_i32 = arith.constant 0 : i32
    %c0_i32_0 = arith.constant 0 : i32
    %c0_i32_1 = arith.constant 0 : i32
    return %arg1, %c0_i32, %c0_i32_0 : i32, i32, i32
  }
  func.func @transform_6(%arg0: i32, %arg1: i32) -> (i32, i32, i32, i32) {
    %c0_i32 = arith.constant 0 : i32
    %c0_i32_0 = arith.constant 0 : i32
    %c0_i32_1 = arith.constant 0 : i32
    %c0_i32_2 = arith.constant 0 : i32
    return %arg1, %c0_i32, %c0_i32_0, %c0_i32_1 : i32, i32, i32, i32
  }
  func.func @transform_7(%arg0: i32, %arg1: i32) -> (i32, i32, i32, i32) {
    %c0_i32 = arith.constant 0 : i32
    %c0_i32_0 = arith.constant 0 : i32
    %c0_i32_1 = arith.constant 0 : i32
    %c0_i32_2 = arith.constant 0 : i32
    return %arg1, %c0_i32, %c0_i32_0, %c0_i32_1 : i32, i32, i32, i32
  }
  func.func @transform_8(%arg0: i32, %arg1: i32) -> (i32, i32, i32, i32) {
    %c0_i32 = arith.constant 0 : i32
    %c0_i32_0 = arith.constant 0 : i32
    %c0_i32_1 = arith.constant 0 : i32
    %c0_i32_2 = arith.constant 0 : i32
    return %arg1, %c0_i32, %c0_i32_0, %c0_i32_1 : i32, i32, i32, i32
  }
  func.func @transform_9(%arg0: i32, %arg1: i32) -> (i32, i32, i32, i32) {
    %c0_i32 = arith.constant 0 : i32
    %c0_i32_0 = arith.constant 0 : i32
    %c0_i32_1 = arith.constant 0 : i32
    %c0_i32_2 = arith.constant 0 : i32
    return %arg1, %c0_i32, %c0_i32_0, %c0_i32_1 : i32, i32, i32, i32
  }
  func.func @transform_10(%arg0: i32, %arg1: i32) -> (i32, i32, i32) {
    %c0_i32 = arith.constant 0 : i32
    %c0_i32_0 = arith.constant 0 : i32
    %c0_i32_1 = arith.constant 0 : i32
    return %arg1, %c0_i32, %c0_i32_0 : i32, i32, i32
  }
  func.func @transform_11(%arg0: i32, %arg1: i32) -> (i32, i32, i32) {
    %c0_i32 = arith.constant 0 : i32
    %c0_i32_0 = arith.constant 0 : i32
    %c0_i32_1 = arith.constant 0 : i32
    return %arg1, %c0_i32, %c0_i32_0 : i32, i32, i32
  }
  func.func @transform_12(%arg0: i32, %arg1: i32) -> (i32, i32, i32) {
    %c0_i32 = arith.constant 0 : i32
    %c0_i32_0 = arith.constant 0 : i32
    %c0_i32_1 = arith.constant 0 : i32
    return %arg0, %c0_i32, %c0_i32_0 : i32, i32, i32
  }
  func.func @transform_13(%arg0: i32, %arg1: i32) -> (i32, i32, i32) {
    %c0_i32 = arith.constant 0 : i32
    %c0_i32_0 = arith.constant 0 : i32
    %c0_i32_1 = arith.constant 0 : i32
    return %arg0, %c0_i32, %c0_i32_0 : i32, i32, i32
  }
}

</mosaic_0001>

<llo_original>
// kernel: tpu_custom_call.1
$region0: #{tpu_custom_call.1}
  #allocation0 [shape = 'u32[]', space=smem, size = 0x4, offset = 0x4, fixed_abs, tag = 'smem constant byte address 0x4 - core index']
  #allocation1 [shape = 'u32[144,128]{1,0:T(1,128)}', space=vmem, size = 0x12000, scoped, tag = 'internal scratch']
  %s0 = inlined_call_operand.vmem [shape: f32[2,8,128], index: 0, kind: input, shape index: {}]
  %s1 = inlined_call_operand.vmem [shape: f32[2,1,128], index: 1, kind: input, shape index: {}]
  %s2 = inlined_call_operand.vmem [shape: f32[2,8,8], index: 2, kind: input, shape index: {}]
  %s3 = inlined_call_operand.vmem [shape: f32[2,8,1], index: 3, kind: input, shape index: {}]
  %s4 = inlined_call_operand.vmem [shape: f32[2,16,4], index: 4, kind: input, shape index: {}]
  %s5 = inlined_call_operand.vmem [shape: f32[2,16,1], index: 5, kind: input, shape index: {}]
  %s6 = inlined_call_operand.vmem [shape: f32[2,3,32,80], index: 6, kind: input, shape index: {}]
  %s7 = inlined_call_operand.vmem [shape: f32[2,3,32,1], index: 7, kind: input, shape index: {}]
  %s8 = inlined_call_operand.vmem [shape: f32[2,3,32,16], index: 8, kind: input, shape index: {}]
  %s9 = inlined_call_operand.vmem [shape: f32[2,3,32,1], index: 9, kind: input, shape index: {}]
  %s10 = inlined_call_operand.vmem [shape: f32[2,8,16], index: 10, kind: input, shape index: {}]
  %s11 = inlined_call_operand.vmem [shape: f32[2,8,1], index: 11, kind: input, shape index: {}]
  %s12 = inlined_call_operand.hbm [shape: f32[2,8,128], index: 12, kind: output, shape index: {0}]
  %s13 = inlined_call_operand.vmem [shape: f32[2,1,1], index: 13, kind: output, shape index: {1}]
  %14 = xla_tuple %s12, %s13
  %s15 = sld [smem:[#allocation0]]
  $region93: #{tpu_custom_call.1} parent=0
    _
  %s17 = ssub.s32 1, %s15
  %s18 = scalar_select 0, %s17, %s15
  $region1: #{tpu_custom_call.1} parent=0
    #allocation2 [shape = 'u8[8192]{0}', space=vmem, size = 0x2000, scoped, tag = 'output window, operand 0']
    #allocation3 [shape = 's32[2]{0}', space=sflag, size = 0x8, scoped, tag = 'scoped memory for tpu_custom_call.1']
    %19 = vsyncpa [#allocation3], 0
    %s20 = scalar_lea.sflag [#allocation3], 1
    %21 = vsyncpa %s20, 0
    loop: start=0, step=1, limit=6
    $region2: #{tpu_custom_call.1} parent=1 // loop_pre_header
      _
    $region3: #{tpu_custom_call.1} parent=1 // loop_header
      %s23 = sphi 0, %s27
      %p24 = scmp.ge.s32.totalorder %s23, 6
      %s30 = sphi 0, %s42
      %s31 = sphi 0, %s38
      %s32 = sphi 0, %s30
      %s33 = sphi 0, %s31
      %s34 = sphi 0, %s32
      %s35 = sphi 0, %s33
      %s45 = sphi 0, %s47
      %s48 = sphi 0, %s45
      %s49 = sphi 0, %s48
      %s65 = sphi 0, %s49
      %s71 = sphi 0, %s73
      %s74 = sphi 0, %s71
      %s75 = sphi 0, %s74
      %s91 = sphi 0, %s75
      %s97 = sphi 0, %s99
      %s100 = sphi 0, %s97
      %s101 = sphi 0, %s100
      %s117 = sphi 0, %s101
      %s123 = sphi 0, %s125
      %s126 = sphi 0, %s123
      %s127 = sphi 0, %s126
      %s143 = sphi 0, %s127
      %s149 = sphi 0, %s151
      %s152 = sphi 0, %s149
      %s153 = sphi 0, %s152
      %s169 = sphi 0, %s153
      %s175 = sphi 0, %s177
      %s178 = sphi 0, %s175
      %s179 = sphi 0, %s178
      %s195 = sphi 0, %s179
      %s201 = sphi 0, %s203
      %s204 = sphi 0, %s201
      %s205 = sphi 0, %s204
      %s221 = sphi 0, %s205
      %s227 = sphi 0, %s229
      %s230 = sphi 0, %s227
      %s231 = sphi 0, %s230
      %s247 = sphi 0, %s231
      %s253 = sphi 0, %s255
      %s256 = sphi 0, %s253
      %s257 = sphi 0, %s256
      %s273 = sphi 0, %s257
      %s279 = sphi 0, %s281
      %s282 = sphi 0, %s279
      %s283 = sphi 0, %s282
      %s299 = sphi 0, %s283
      %s305 = sphi 0, %s307
      %s308 = sphi 0, %s305
      %s309 = sphi 0, %s308
      %s325 = sphi 0, %s309
      %s331 = sphi 0, %s333
      %s334 = sphi 0, %s331
      %s335 = sphi 0, %s334
      %s351 = sphi 0, %s335
      %s357 = sphi 0, %s359
      %s360 = sphi 0, %s357
      %s361 = sphi 0, %s360
      %s377 = sphi 0, %s361
      %s383 = sphi 0, %s385
      %s386 = sphi 0, %s383
      %s387 = sphi 0, %s386
      %s403 = sphi 0, %s387
    $region4: #{tpu_custom_call.1} parent=1 // loop_header_branch
      %26 = sbr.rel (%p24) target = $region8
    $region5: #{tpu_custom_call.1} parent=1 // loop_body
      %s28 = ssub.s32 %s23, 1
      %s29 = ssub.s32 %s23, 2
      %s36 = sadd.s32 1, %s31
      %p37 = scmp.ge.s32.totalorder %s36, 2
      %s38 = scalar_select %p37, 0, %s36
      %s39 = sadd.s32 1, %s30
      %s40 = scalar_select %p37, %s39, %s30
      %p41 = scmp.ge.s32.totalorder %s40, 2
      %s42 = scalar_select %p41, 0, %s40
      %s43 = ssub.s32 %s30, %s42
      %p44 = scmp.eq.s32.totalorder %s43, 0
      %s46 = sadd.s32 %s45, 1
      %s47 = scalar_select %p44, %s45, %s46
      %p50 = pneg %p44
      %p51 = scmp.eq.s32.totalorder %s23, 3
      %p52 = por %p50, %p51
      %p53 = scmp.ne.s32.totalorder %s45, %s48
      %p54 = scmp.eq.s32.totalorder %s23, 0
      %p55 = por %p53, %p54
      %p56 = scmp.ne.s32.totalorder %s45, %s48
      %p57 = scmp.eq.s32.totalorder %s28, 3
      %p58 = por %p56, %p57
      %p59 = scmp.ne.s32.totalorder %s48, %s49
      %p60 = scmp.eq.s32.totalorder %s28, 0
      %p61 = por %p59, %p60
      %p62 = scmp.ne.s32.totalorder %s48, %s49
      %p63 = scmp.eq.s32.totalorder %s29, 3
      %p64 = por %p62, %p63
      %p66 = scmp.ne.s32.totalorder %s49, %s65
      %p67 = scmp.eq.s32.totalorder %s29, 0
      %p68 = por %p66, %p67
      %s69 = ssub.s32 %s30, %s42
      %p70 = scmp.eq.s32.totalorder %s69, 0
      %s72 = sadd.s32 %s71, 1
      %s73 = scalar_select %p70, %s71, %s72
      %p76 = pneg %p70
      %p77 = scmp.eq.s32.totalorder %s23, 3
      %p78 = por %p76, %p77
      %p79 = scmp.ne.s32.totalorder %s71, %s74
      %p80 = scmp.eq.s32.totalorder %s23, 0
      %p81 = por %p79, %p80
      %p82 = scmp.ne.s32.totalorder %s71, %s74
      %p83 = scmp.eq.s32.totalorder %s28, 3
      %p84 = por %p82, %p83
      %p85 = scmp.ne.s32.totalorder %s74, %s75
      %p86 = scmp.eq.s32.totalorder %s28, 0
      %p87 = por %p85, %p86
      %p88 = scmp.ne.s32.totalorder %s74, %s75
      %p89 = scmp.eq.s32.totalorder %s29, 3
      %p90 = por %p88, %p89
      %p92 = scmp.ne.s32.totalorder %s75, %s91
      %p93 = scmp.eq.s32.totalorder %s29, 0
      %p94 = por %p92, %p93
      %s95 = ssub.s32 %s31, %s38
      %p96 = scmp.eq.s32.totalorder %s95, 0
      %s98 = sadd.s32 %s97, 1
      %s99 = scalar_select %p96, %s97, %s98
      %p102 = pneg %p96
      %p103 = scmp.eq.s32.totalorder %s23, 3
      %p104 = por %p102, %p103
      %p105 = scmp.ne.s32.totalorder %s97, %s100
      %p106 = scmp.eq.s32.totalorder %s23, 0
      %p107 = por %p105, %p106
      %p108 = scmp.ne.s32.totalorder %s97, %s100
      %p109 = scmp.eq.s32.totalorder %s28, 3
      %p110 = por %p108, %p109
      %p111 = scmp.ne.s32.totalorder %s100, %s101
      %p112 = scmp.eq.s32.totalorder %s28, 0
      %p113 = por %p111, %p112
      %p114 = scmp.ne.s32.totalorder %s100, %s101
      %p115 = scmp.eq.s32.totalorder %s29, 3
      %p116 = por %p114, %p115
      %p118 = scmp.ne.s32.totalorder %s101, %s117
      %p119 = scmp.eq.s32.totalorder %s29, 0
      %p120 = por %p118, %p119
      %s121 = ssub.s32 %s31, %s38
      %p122 = scmp.eq.s32.totalorder %s121, 0
      %s124 = sadd.s32 %s123, 1
      %s125 = scalar_select %p122, %s123, %s124
      %p128 = pneg %p122
      %p129 = scmp.eq.s32.totalorder %s23, 3
      %p130 = por %p128, %p129
      %p131 = scmp.ne.s32.totalorder %s123, %s126
      %p132 = scmp.eq.s32.totalorder %s23, 0
      %p133 = por %p131, %p132
      %p134 = scmp.ne.s32.totalorder %s123, %s126
      %p135 = scmp.eq.s32.totalorder %s28, 3
      %p136 = por %p134, %p135
      %p137 = scmp.ne.s32.totalorder %s126, %s127
      %p138 = scmp.eq.s32.totalorder %s28, 0
      %p139 = por %p137, %p138
      %p140 = scmp.ne.s32.totalorder %s126, %s127
      %p141 = scmp.eq.s32.totalorder %s29, 3
      %p142 = por %p140, %p141
      %p144 = scmp.ne.s32.totalorder %s127, %s143
      %p145 = scmp.eq.s32.totalorder %s29, 0
      %p146 = por %p144, %p145
      %s147 = ssub.s32 %s31, %s38
      %p148 = scmp.eq.s32.totalorder %s147, 0
      %s150 = sadd.s32 %s149, 1
      %s151 = scalar_select %p148, %s149, %s150
      %p154 = pneg %p148
      %p155 = scmp.eq.s32.totalorder %s23, 3
      %p156 = por %p154, %p155
      %p157 = scmp.ne.s32.totalorder %s149, %s152
      %p158 = scmp.eq.s32.totalorder %s23, 0
      %p159 = por %p157, %p158
      %p160 = scmp.ne.s32.totalorder %s149, %s152
      %p161 = scmp.eq.s32.totalorder %s28, 3
      %p162 = por %p160, %p161
      %p163 = scmp.ne.s32.totalorder %s152, %s153
      %p164 = scmp.eq.s32.totalorder %s28, 0
      %p165 = por %p163, %p164
      %p166 = scmp.ne.s32.totalorder %s152, %s153
      %p167 = scmp.eq.s32.totalorder %s29, 3
      %p168 = por %p166, %p167
      %p170 = scmp.ne.s32.totalorder %s153, %s169
      %p171 = scmp.eq.s32.totalorder %s29, 0
      %p172 = por %p170, %p171
      %s173 = ssub.s32 %s31, %s38
      %p174 = scmp.eq.s32.totalorder %s173, 0
      %s176 = sadd.s32 %s175, 1
      %s177 = scalar_select %p174, %s175, %s176
      %p180 = pneg %p174
      %p181 = scmp.eq.s32.totalorder %s23, 3
      %p182 = por %p180, %p181
      %p183 = scmp.ne.s32.totalorder %s175, %s178
      %p184 = scmp.eq.s32.totalorder %s23, 0
      %p185 = por %p183, %p184
      %p186 = scmp.ne.s32.totalorder %s175, %s178
      %p187 = scmp.eq.s32.totalorder %s28, 3
      %p188 = por %p186, %p187
      %p189 = scmp.ne.s32.totalorder %s178, %s179
      %p190 = scmp.eq.s32.totalorder %s28, 0
      %p191 = por %p189, %p190
      %p192 = scmp.ne.s32.totalorder %s178, %s179
      %p193 = scmp.eq.s32.totalorder %s29, 3
      %p194 = por %p192, %p193
      %p196 = scmp.ne.s32.totalorder %s179, %s195
      %p197 = scmp.eq.s32.totalorder %s29, 0
      %p198 = por %p196, %p197
      %s199 = ssub.s32 %s31, %s38
      %p200 = scmp.eq.s32.totalorder %s199, 0
      %s202 = sadd.s32 %s201, 1
      %s203 = scalar_select %p200, %s201, %s202
      %p206 = pneg %p200
      %p207 = scmp.eq.s32.totalorder %s23, 3
      %p208 = por %p206, %p207
      %p209 = scmp.ne.s32.totalorder %s201, %s204
      %p210 = scmp.eq.s32.totalorder %s23, 0
      %p211 = por %p209, %p210
      %p212 = scmp.ne.s32.totalorder %s201, %s204
      %p213 = scmp.eq.s32.totalorder %s28, 3
      %p214 = por %p212, %p213
      %p215 = scmp.ne.s32.totalorder %s204, %s205
      %p216 = scmp.eq.s32.totalorder %s28, 0
      %p217 = por %p215, %p216
      %p218 = scmp.ne.s32.totalorder %s204, %s205
      %p219 = scmp.eq.s32.totalorder %s29, 3
      %p220 = por %p218, %p219
      %p222 = scmp.ne.s32.totalorder %s205, %s221
      %p223 = scmp.eq.s32.totalorder %s29, 0
      %p224 = por %p222, %p223
      %s225 = ssub.s32 %s31, %s38
      %p226 = scmp.eq.s32.totalorder %s225, 0
      %s228 = sadd.s32 %s227, 1
      %s229 = scalar_select %p226, %s227, %s228
      %p232 = pneg %p226
      %p233 = scmp.eq.s32.totalorder %s23, 3
      %p234 = por %p232, %p233
      %p235 = scmp.ne.s32.totalorder %s227, %s230
      %p236 = scmp.eq.s32.totalorder %s23, 0
      %p237 = por %p235, %p236
      %p238 = scmp.ne.s32.totalorder %s227, %s230
      %p239 = scmp.eq.s32.totalorder %s28, 3
      %p240 = por %p238, %p239
      %p241 = scmp.ne.s32.totalorder %s230, %s231
      %p242 = scmp.eq.s32.totalorder %s28, 0
      %p243 = por %p241, %p242
      %p244 = scmp.ne.s32.totalorder %s230, %s231
      %p245 = scmp.eq.s32.totalorder %s29, 3
      %p246 = por %p244, %p245
      %p248 = scmp.ne.s32.totalorder %s231, %s247
      %p249 = scmp.eq.s32.totalorder %s29, 0
      %p250 = por %p248, %p249
      %s251 = ssub.s32 %s31, %s38
      %p252 = scmp.eq.s32.totalorder %s251, 0
      %s254 = sadd.s32 %s253, 1
      %s255 = scalar_select %p252, %s253, %s254
      %p258 = pneg %p252
      %p259 = scmp.eq.s32.totalorder %s23, 3
      %p260 = por %p258, %p259
      %p261 = scmp.ne.s32.totalorder %s253, %s256
      %p262 = scmp.eq.s32.totalorder %s23, 0
      %p263 = por %p261, %p262
      %p264 = scmp.ne.s32.totalorder %s253, %s256
      %p265 = scmp.eq.s32.totalorder %s28, 3
      %p266 = por %p264, %p265
      %p267 = scmp.ne.s32.totalorder %s256, %s257
      %p268 = scmp.eq.s32.totalorder %s28, 0
      %p269 = por %p267, %p268
      %p270 = scmp.ne.s32.totalorder %s256, %s257
      %p271 = scmp.eq.s32.totalorder %s29, 3
      %p272 = por %p270, %p271
      %p274 = scmp.ne.s32.totalorder %s257, %s273
      %p275 = scmp.eq.s32.totalorder %s29, 0
      %p276 = por %p274, %p275
      %s277 = ssub.s32 %s31, %s38
      %p278 = scmp.eq.s32.totalorder %s277, 0
      %s280 = sadd.s32 %s279, 1
      %s281 = scalar_select %p278, %s279, %s280
      %p284 = pneg %p278
      %p285 = scmp.eq.s32.totalorder %s23, 3
      %p286 = por %p284, %p285
      %p287 = scmp.ne.s32.totalorder %s279, %s282
      %p288 = scmp.eq.s32.totalorder %s23, 0
      %p289 = por %p287, %p288
      %p290 = scmp.ne.s32.totalorder %s279, %s282
      %p291 = scmp.eq.s32.totalorder %s28, 3
      %p292 = por %p290, %p291
      %p293 = scmp.ne.s32.totalorder %s282, %s283
      %p294 = scmp.eq.s32.totalorder %s28, 0
      %p295 = por %p293, %p294
      %p296 = scmp.ne.s32.totalorder %s282, %s283
      %p297 = scmp.eq.s32.totalorder %s29, 3
      %p298 = por %p296, %p297
      %p300 = scmp.ne.s32.totalorder %s283, %s299
      %p301 = scmp.eq.s32.totalorder %s29, 0
      %p302 = por %p300, %p301
      %s303 = ssub.s32 %s31, %s38
      %p304 = scmp.eq.s32.totalorder %s303, 0
      %s306 = sadd.s32 %s305, 1
      %s307 = scalar_select %p304, %s305, %s306
      %p310 = pneg %p304
      %p311 = scmp.eq.s32.totalorder %s23, 3
      %p312 = por %p310, %p311
      %p313 = scmp.ne.s32.totalorder %s305, %s308
      %p314 = scmp.eq.s32.totalorder %s23, 0
      %p315 = por %p313, %p314
      %p316 = scmp.ne.s32.totalorder %s305, %s308
      %p317 = scmp.eq.s32.totalorder %s28, 3
      %p318 = por %p316, %p317
      %p319 = scmp.ne.s32.totalorder %s308, %s309
      %p320 = scmp.eq.s32.totalorder %s28, 0
      %p321 = por %p319, %p320
      %p322 = scmp.ne.s32.totalorder %s308, %s309
      %p323 = scmp.eq.s32.totalorder %s29, 3
      %p324 = por %p322, %p323
      %p326 = scmp.ne.s32.totalorder %s309, %s325
      %p327 = scmp.eq.s32.totalorder %s29, 0
      %p328 = por %p326, %p327
      %s329 = ssub.s32 %s31, %s38
      %p330 = scmp.eq.s32.totalorder %s329, 0
      %s332 = sadd.s32 %s331, 1
      %s333 = scalar_select %p330, %s331, %s332
      %p336 = pneg %p330
      %p337 = scmp.eq.s32.totalorder %s23, 3
      %p338 = por %p336, %p337
      %p339 = scmp.ne.s32.totalorder %s331, %s334
      %p340 = scmp.eq.s32.totalorder %s23, 0
      %p341 = por %p339, %p340
      %p342 = scmp.ne.s32.totalorder %s331, %s334
      %p343 = scmp.eq.s32.totalorder %s28, 3
      %p344 = por %p342, %p343
      %p345 = scmp.ne.s32.totalorder %s334, %s335
      %p346 = scmp.eq.s32.totalorder %s28, 0
      %p347 = por %p345, %p346
      %p348 = scmp.ne.s32.totalorder %s334, %s335
      %p349 = scmp.eq.s32.totalorder %s29, 3
      %p350 = por %p348, %p349
      %p352 = scmp.ne.s32.totalorder %s335, %s351
      %p353 = scmp.eq.s32.totalorder %s29, 0
      %p354 = por %p352, %p353
      %s355 = ssub.s32 %s30, %s42
      %p356 = scmp.eq.s32.totalorder %s355, 0
      %s358 = sadd.s32 %s357, 1
      %s359 = scalar_select %p356, %s357, %s358
      %p362 = pneg %p356
      %p363 = scmp.eq.s32.totalorder %s23, 3
      %p364 = por %p362, %p363
      %p365 = scmp.ne.s32.totalorder %s357, %s360
      %p366 = scmp.eq.s32.totalorder %s23, 0
      %p367 = por %p365, %p366
      %p368 = scmp.ne.s32.totalorder %s357, %s360
      %p369 = scmp.eq.s32.totalorder %s28, 3
      %p370 = por %p368, %p369
      %p371 = scmp.ne.s32.totalorder %s360, %s361
      %p372 = scmp.eq.s32.totalorder %s28, 0
      %p373 = por %p371, %p372
      %p374 = scmp.ne.s32.totalorder %s360, %s361
      %p375 = scmp.eq.s32.totalorder %s29, 3
      %p376 = por %p374, %p375
      %p378 = scmp.ne.s32.totalorder %s361, %s377
      %p379 = scmp.eq.s32.totalorder %s29, 0
      %p380 = por %p378, %p379
      %s381 = ssub.s32 %s30, %s42
      %p382 = scmp.eq.s32.totalorder %s381, 0
      %s384 = sadd.s32 %s383, 1
      %s385 = scalar_select %p382, %s383, %s384
      %p388 = pneg %p382
      %p389 = scmp.eq.s32.totalorder %s23, 3
      %p390 = por %p388, %p389
      %p391 = scmp.ne.s32.totalorder %s383, %s386
      %p392 = scmp.eq.s32.totalorder %s23, 0
      %p393 = por %p391, %p392
      %p394 = scmp.ne.s32.totalorder %s383, %s386
      %p395 = scmp.eq.s32.totalorder %s28, 3
      %p396 = por %p394, %p395
      %p397 = scmp.ne.s32.totalorder %s386, %s387
      %p398 = scmp.eq.s32.totalorder %s28, 0
      %p399 = por %p397, %p398
      %p400 = scmp.ne.s32.totalorder %s386, %s387
      %p401 = scmp.eq.s32.totalorder %s29, 3
      %p402 = por %p400, %p401
      %p404 = scmp.ne.s32.totalorder %s387, %s403
      %p405 = scmp.eq.s32.totalorder %s29, 0
      %p406 = por %p404, %p405
      %p407 = scmp.le.s32.totalorder 1, %s23
      %p408 = scmp.lt.s32.totalorder %s23, 5
      %p409 = pnand %p407, %p408
      %p410 = pneg %p409
      // Predicated region
      $region9: #{tpu_custom_call.1} parent=5 // pred_check
        _
      $region10: #{tpu_custom_call.1} parent=5 // pred_check_branch
        %412 = sbr.rel (%p409) target = $region12
      $region11: #{tpu_custom_call.1} parent=5 // pred_region
        %s413 = ssub.s32 %s23, 1
      $region12: #{tpu_custom_call.1} parent=5 // pred_fallthru
        _
      %p414 = scmp.lt.s32.totalorder %s23, 4
      // Predicated region
      $region13: #{tpu_custom_call.1} parent=5 // pred_check
        %p415 = pneg %p414
      $region14: #{tpu_custom_call.1} parent=5 // pred_check_branch
        %417 = sbr.rel (%p415) target = $region16
      $region15: #{tpu_custom_call.1} parent=5 // pred_region
        // Predicated region
        $region17: #{tpu_custom_call.1} parent=15 // pred_check
          %p418 = pneg %p55
        $region18: #{tpu_custom_call.1} parent=15 // pred_check_branch
          %420 = sbr.rel (%p418) target = $region20
        $region19: #{tpu_custom_call.1} parent=15 // pred_region
          %p421 = scmp.lt.s32.totalorder %s30, 1
          %s422 = scalar_select %p421, %s30, 1
          %s423 = smul.addr %s422, 8
          %s424 = scalar_lea.vmem %s0, %s423
        $region20: #{tpu_custom_call.1} parent=15 // pred_fallthru
          _
        // Predicated region
        $region21: #{tpu_custom_call.1} parent=15 // pred_check
          %p425 = pneg %p81
        $region22: #{tpu_custom_call.1} parent=15 // pred_check_branch
          %427 = sbr.rel (%p425) target = $region24
        $region23: #{tpu_custom_call.1} parent=15 // pred_region
          %p428 = scmp.lt.s32.totalorder %s30, 1
          %s429 = scalar_select %p428, %s30, 1
          %s430 = scalar_lea.vmem %s1, %s429
        $region24: #{tpu_custom_call.1} parent=15 // pred_fallthru
          _
        // Predicated region
        $region25: #{tpu_custom_call.1} parent=15 // pred_check
          %p431 = pneg %p107
        $region26: #{tpu_custom_call.1} parent=15 // pred_check_branch
          %433 = sbr.rel (%p431) target = $region28
        $region27: #{tpu_custom_call.1} parent=15 // pred_region
          %p434 = scmp.lt.s32.totalorder %s31, 1
          %s435 = scalar_select %p434, %s31, 1
          %s436 = smul.addr %s435, 8
          %s437 = scalar_lea.vmem %s2, %s436
        $region28: #{tpu_custom_call.1} parent=15 // pred_fallthru
          _
        // Predicated region
        $region29: #{tpu_custom_call.1} parent=15 // pred_check
          %p438 = pneg %p133
        $region30: #{tpu_custom_call.1} parent=15 // pred_check_branch
          %440 = sbr.rel (%p438) target = $region32
        $region31: #{tpu_custom_call.1} parent=15 // pred_region
          %p441 = scmp.lt.s32.totalorder %s31, 1
          %s442 = scalar_select %p441, %s31, 1
          %s443 = smul.addr %s442, 8
          %s444 = scalar_lea.vmem %s3, %s443
        $region32: #{tpu_custom_call.1} parent=15 // pred_fallthru
          _
        // Predicated region
        $region33: #{tpu_custom_call.1} parent=15 // pred_check
          %p445 = pneg %p159
        $region34: #{tpu_custom_call.1} parent=15 // pred_check_branch
          %447 = sbr.rel (%p445) target = $region36
        $region35: #{tpu_custom_call.1} parent=15 // pred_region
          %p448 = scmp.lt.s32.totalorder %s31, 1
          %s449 = scalar_select %p448, %s31, 1
          %s450 = smul.addr %s449, 2
          %s451 = smul.addr %s450, 8
          %s452 = scalar_lea.vmem %s4, %s451
        $region36: #{tpu_custom_call.1} parent=15 // pred_fallthru
          _
        // Predicated region
        $region37: #{tpu_custom_call.1} parent=15 // pred_check
          %p453 = pneg %p185
        $region38: #{tpu_custom_call.1} parent=15 // pred_check_branch
          %455 = sbr.rel (%p453) target = $region40
        $region39: #{tpu_custom_call.1} parent=15 // pred_region
          %p456 = scmp.lt.s32.totalorder %s31, 1
          %s457 = scalar_select %p456, %s31, 1
          %s458 = smul.addr %s457, 2
          %s459 = smul.addr %s458, 8
          %s460 = scalar_lea.vmem %s5, %s459
        $region40: #{tpu_custom_call.1} parent=15 // pred_fallthru
          _
        // Predicated region
        $region41: #{tpu_custom_call.1} parent=15 // pred_check
          %p461 = pneg %p211
        $region42: #{tpu_custom_call.1} parent=15 // pred_check_branch
          %463 = sbr.rel (%p461) target = $region44
        $region43: #{tpu_custom_call.1} parent=15 // pred_region
          %p464 = scmp.lt.s32.totalorder %s31, 1
          %s465 = scalar_select %p464, %s31, 1
          %s466 = smul.addr %s465, 12
          %s467 = smul.addr %s466, 8
          %s468 = scalar_lea.vmem %s6, %s467
        $region44: #{tpu_custom_call.1} parent=15 // pred_fallthru
          _
        // Predicated region
        $region45: #{tpu_custom_call.1} parent=15 // pred_check
          %p469 = pneg %p237
        $region46: #{tpu_custom_call.1} parent=15 // pred_check_branch
          %471 = sbr.rel (%p469) target = $region48
        $region47: #{tpu_custom_call.1} parent=15 // pred_region
          %p472 = scmp.lt.s32.totalorder %s31, 1
          %s473 = scalar_select %p472, %s31, 1
          %s474 = smul.addr %s473, 12
          %s475 = smul.addr %s474, 8
          %s476 = scalar_lea.vmem %s7, %s475
        $region48: #{tpu_custom_call.1} parent=15 // pred_fallthru
          _
        // Predicated region
        $region49: #{tpu_custom_call.1} parent=15 // pred_check
          %p477 = pneg %p263
        $region50: #{tpu_custom_call.1} parent=15 // pred_check_branch
          %479 = sbr.rel (%p477) target = $region52
        $region51: #{tpu_custom_call.1} parent=15 // pred_region
          %p480 = scmp.lt.s32.totalorder %s31, 1
          %s481 = scalar_select %p480, %s31, 1
          %s482 = smul.addr %s481, 12
          %s483 = smul.addr %s482, 8
          %s484 = scalar_lea.vmem %s8, %s483
        $region52: #{tpu_custom_call.1} parent=15 // pred_fallthru
          _
        // Predicated region
        $region53: #{tpu_custom_call.1} parent=15 // pred_check
          %p485 = pneg %p289
        $region54: #{tpu_custom_call.1} parent=15 // pred_check_branch
          %487 = sbr.rel (%p485) target = $region56
        $region55: #{tpu_custom_call.1} parent=15 // pred_region
          %p488 = scmp.lt.s32.totalorder %s31, 1
          %s489 = scalar_select %p488, %s31, 1
          %s490 = smul.addr %s489, 12
          %s491 = smul.addr %s490, 8
          %s492 = scalar_lea.vmem %s9, %s491
        $region56: #{tpu_custom_call.1} parent=15 // pred_fallthru
          _
        // Predicated region
        $region57: #{tpu_custom_call.1} parent=15 // pred_check
          %p493 = pneg %p315
        $region58: #{tpu_custom_call.1} parent=15 // pred_check_branch
          %495 = sbr.rel (%p493) target = $region60
        $region59: #{tpu_custom_call.1} parent=15 // pred_region
          %p496 = scmp.lt.s32.totalorder %s31, 1
          %s497 = scalar_select %p496, %s31, 1
          %s498 = smul.addr %s497, 8
          %s499 = scalar_lea.vmem %s10, %s498
        $region60: #{tpu_custom_call.1} parent=15 // pred_fallthru
          _
        // Predicated region
        $region61: #{tpu_custom_call.1} parent=15 // pred_check
          %p500 = pneg %p341
        $region62: #{tpu_custom_call.1} parent=15 // pred_check_branch
          %502 = sbr.rel (%p500) target = $region64
        $region63: #{tpu_custom_call.1} parent=15 // pred_region
          %p503 = scmp.lt.s32.totalorder %s31, 1
          %s504 = scalar_select %p503, %s31, 1
          %s505 = smul.addr %s504, 8
          %s506 = scalar_lea.vmem %s11, %s505
        $region64: #{tpu_custom_call.1} parent=15 // pred_fallthru
          _
      $region16: #{tpu_custom_call.1} parent=5 // pred_fallthru
        _
      %p507 = scmp.le.s32.totalorder 1, %s23
      %p508 = scmp.lt.s32.totalorder %s23, 5
      %p509 = pnand %p507, %p508
      %p510 = pneg %p509
      // Predicated region
      $region65: #{tpu_custom_call.1} parent=5 // pred_check
        _
      $region66: #{tpu_custom_call.1} parent=5 // pred_check_branch
        %512 = sbr.rel (%p509) target = $region68
      $region67: #{tpu_custom_call.1} parent=5 // pred_region
        %s513 = ssub.s32 %s23, 1
        %p514 = scmp.lt.s32.totalorder %s32, 1
        %s515 = scalar_select %p514, %s32, 1
        %s516 = smul.addr %s515, 8
        %s517 = scalar_lea.vmem %s0, %s516
        %p518 = pneg %p61
        %p519 = pneg %p58
        %p520 = scmp.lt.s32.totalorder %s32, 1
        %s521 = scalar_select %p520, %s32, 1
        %s522 = scalar_lea.vmem %s1, %s521
        %p523 = pneg %p87
        %p524 = pneg %p84
        %p525 = scmp.lt.s32.totalorder %s33, 1
        %s526 = scalar_select %p525, %s33, 1
        %s527 = smul.addr %s526, 8
        %s528 = scalar_lea.vmem %s2, %s527
        %p529 = pneg %p113
        %p530 = pneg %p110
        %p531 = scmp.lt.s32.totalorder %s33, 1
        %s532 = scalar_select %p531, %s33, 1
        %s533 = smul.addr %s532, 8
        %s534 = scalar_lea.vmem %s3, %s533
        %p535 = pneg %p139
        %p536 = pneg %p136
        %p537 = scmp.lt.s32.totalorder %s33, 1
        %s538 = scalar_select %p537, %s33, 1
        %s539 = smul.addr %s538, 2
        %s540 = smul.addr %s539, 8
        %s541 = scalar_lea.vmem %s4, %s540
        %p542 = pneg %p165
        %p543 = pneg %p162
        %p544 = scmp.lt.s32.totalorder %s33, 1
        %s545 = scalar_select %p544, %s33, 1
        %s546 = smul.addr %s545, 2
        %s547 = smul.addr %s546, 8
        %s548 = scalar_lea.vmem %s5, %s547
        %p549 = pneg %p191
        %p550 = pneg %p188
        %p551 = scmp.lt.s32.totalorder %s33, 1
        %s552 = scalar_select %p551, %s33, 1
        %s553 = smul.addr %s552, 12
        %s554 = smul.addr %s553, 8
        %s555 = scalar_lea.vmem %s6, %s554
        %p556 = pneg %p217
        %p557 = pneg %p214
        %p558 = scmp.lt.s32.totalorder %s33, 1
        %s559 = scalar_select %p558, %s33, 1
        %s560 = smul.addr %s559, 12
        %s561 = smul.addr %s560, 8
        %s562 = scalar_lea.vmem %s7, %s561
        %p563 = pneg %p243
        %p564 = pneg %p240
        %p565 = scmp.lt.s32.totalorder %s33, 1
        %s566 = scalar_select %p565, %s33, 1
        %s567 = smul.addr %s566, 12
        %s568 = smul.addr %s567, 8
        %s569 = scalar_lea.vmem %s8, %s568
        %p570 = pneg %p269
        %p571 = pneg %p266
        %p572 = scmp.lt.s32.totalorder %s33, 1
        %s573 = scalar_select %p572, %s33, 1
        %s574 = smul.addr %s573, 12
        %s575 = smul.addr %s574, 8
        %s576 = scalar_lea.vmem %s9, %s575
        %p577 = pneg %p295
        %p578 = pneg %p292
        %p579 = scmp.lt.s32.totalorder %s33, 1
        %s580 = scalar_select %p579, %s33, 1
        %s581 = smul.addr %s580, 8
        %s582 = scalar_lea.vmem %s10, %s581
        %p583 = pneg %p321
        %p584 = pneg %p318
        %p585 = scmp.lt.s32.totalorder %s33, 1
        %s586 = scalar_select %p585, %s33, 1
        %s587 = smul.addr %s586, 8
        %s588 = scalar_lea.vmem %s11, %s587
        %p589 = pneg %p347
        %p590 = pneg %p344
        %p591 = pneg %p373
        %p592 = pneg %p370
        %s593 = sand.u32 %s360, 1
        %s594 = scalar_lea.sflag [#allocation3], %s593
        %s595 = sand.u32 %s360, 1
        %s596 = smul.addr %s595, 8
        %s597 = scalar_lea.vmem [#allocation2], %s596
        %p598 = pneg %p399
        %p599 = pneg %p396
        %p600 = scmp.lt.s32.totalorder %s32, 1
        %s601 = scalar_select %p600, %s32, 1
        %s602 = scalar_lea.vmem %s13, %s601
        %p603 = scmp.lt.s32.totalorder %s32, 1
        %s604 = scalar_select %p603, %s32, 1
        %s605 = smul.addr %s604, 8
        %s606 = scalar_lea.vmem %s0, %s605
        %p607 = scmp.lt.s32.totalorder %s32, 1
        %s608 = scalar_select %p607, %s32, 1
        %s609 = scalar_lea.vmem %s1, %s608
        %p610 = scmp.lt.s32.totalorder %s33, 1
        %s611 = scalar_select %p610, %s33, 1
        %s612 = smul.addr %s611, 8
        %s613 = scalar_lea.vmem %s2, %s612
        %p614 = scmp.lt.s32.totalorder %s33, 1
        %s615 = scalar_select %p614, %s33, 1
        %s616 = smul.addr %s615, 8
        %s617 = scalar_lea.vmem %s3, %s616
        %p618 = scmp.lt.s32.totalorder %s33, 1
        %s619 = scalar_select %p618, %s33, 1
        %s620 = smul.addr %s619, 2
        %s621 = smul.addr %s620, 8
        %s622 = scalar_lea.vmem %s4, %s621
        %p623 = scmp.lt.s32.totalorder %s33, 1
        %s624 = scalar_select %p623, %s33, 1
        %s625 = smul.addr %s624, 2
        %s626 = smul.addr %s625, 8
        %s627 = scalar_lea.vmem %s5, %s626
        %p628 = scmp.lt.s32.totalorder %s33, 1
        %s629 = scalar_select %p628, %s33, 1
        %s630 = smul.addr %s629, 12
        %s631 = smul.addr %s630, 8
        %s632 = scalar_lea.vmem %s6, %s631
        %p633 = scmp.lt.s32.totalorder %s33, 1
        %s634 = scalar_select %p633, %s33, 1
        %s635 = smul.addr %s634, 12
        %s636 = smul.addr %s635, 8
        %s637 = scalar_lea.vmem %s7, %s636
        %p638 = scmp.lt.s32.totalorder %s33, 1
        %s639 = scalar_select %p638, %s33, 1
        %s640 = smul.addr %s639, 12
        %s641 = smul.addr %s640, 8
        %s642 = scalar_lea.vmem %s8, %s641
        %p643 = scmp.lt.s32.totalorder %s33, 1
        %s644 = scalar_select %p643, %s33, 1
        %s645 = smul.addr %s644, 12
        %s646 = smul.addr %s645, 8
        %s647 = scalar_lea.vmem %s9, %s646
        %p648 = scmp.lt.s32.totalorder %s33, 1
        %s649 = scalar_select %p648, %s33, 1
        %s650 = smul.addr %s649, 8
        %s651 = scalar_lea.vmem %s10, %s650
        %p652 = scmp.lt.s32.totalorder %s33, 1
        %s653 = scalar_select %p652, %s33, 1
        %s654 = smul.addr %s653, 8
        %s655 = scalar_lea.vmem %s11, %s654
        %p656 = scmp.lt.s32.totalorder %s32, 1
        %s657 = scalar_select %p656, %s32, 1
        %s658 = scalar_lea.vmem %s13, %s657
        %p659 = scmp.eq.s32.totalorder %s33, 0
        // Predicated region
        $region69: #{tpu_custom_call.1} parent=67 // pred_check
          %p660 = pneg %p659
        $region70: #{tpu_custom_call.1} parent=67 // pred_check_branch
          %662 = sbr.rel (%p660) target = $region72
        $region71: #{tpu_custom_call.1} parent=67 // pred_region
          %v663 = vld [vmem:[%s606] sm:$0xff]
          %664 = vst [vmem:[%s597] sm:$0xff] %v663
          %vm665 = vcmask 0
          %666 = vst.msk [vmem:[%s658] sm:$0x1] %vm665, 0.0
        $region72: #{tpu_custom_call.1} parent=67 // pred_fallthru
          _
        %v667 = vld [vmem:[%s609] sm:$0x1]
        %v668 = vld [vmem:[%s597] sm:$0xff]
        %v669 = vld [vmem:[%s613] sm:$0xff]
        %v670 = vld [vmem:[%s617] sm:$0xff]
        %672 = vset.pattern.permute.xlu0 0
        %673 = vperm.xlu0 %672, %v670
        %v674 = vpop.permute.xlu0 %673
        %vm676 = vcmask 64512
        %v678 = vsel %vm676, %v669, 0
        %680 = vmatprep.subr.mxu0 0.0
        %681 = vmatpush1.msra.mxu0 %v668
        %682 = vmatprep.subr.mxu0 0.0
        %683 = vmatpush1.msra.mxu0 0.0
        %684 = vmatprep.subr.mxu0 0.0
        %685 = vmatpush1.msra.mxu0 0.0
        %686 = vmatprep.subr.mxu0 0.0
        %687 = vmatpush1.msra.mxu0 0.0
        %688 = vmatprep.subr.mxu0 0.0
        %689 = vmatpush1.msra.mxu0 0.0
        %690 = vmatprep.subr.mxu0 0.0
        %691 = vmatpush1.msra.mxu0 0.0
        %692 = vmatprep.subr.mxu0 0.0
        %693 = vmatpush1.msra.mxu0 0.0
        %694 = vmatprep.subr.mxu0 0.0
        %695 = vmatpush1.msra.mxu0 0.0
        %696 = vmatprep.subr.mxu0 0.0
        %697 = vmatpush1.msra.mxu0 0.0
        %698 = vmatprep.subr.mxu0 0.0
        %699 = vmatpush1.msra.mxu0 0.0
        %700 = vmatprep.subr.mxu0 0.0
        %701 = vmatpush1.msra.mxu0 0.0
        %702 = vmatprep.subr.mxu0 0.0
        %703 = vmatpush1.msra.mxu0 0.0
        %704 = vmatprep.subr.mxu0 0.0
        %705 = vmatpush1.msra.mxu0 0.0
        %706 = vmatprep.subr.mxu0 0.0
        %707 = vmatpush1.msra.mxu0 0.0
        %708 = vmatprep.subr.mxu0 0.0
        %709 = vmatpush1.msra.mxu0 0.0
        %710 = vmatprep.subr.mxu0 0.0
        %711 = vmatpush1.msra.mxu0 0.0
        %712 = vmatprep.subr.mxu0 0.0
        %713 = vmatpush1.msra.mxu0 0.0
        %714 = vmatprep.subr.mxu0 0.0
        %715 = vmatpush1.msra.mxu0 0.0
        %716 = vmatprep.subr.mxu0 0.0
        %717 = vmatpush1.msra.mxu0 0.0
        %718 = vmatprep.subr.mxu0 0.0
        %719 = vmatpush1.msra.mxu0 0.0
        %720 = vmatprep.subr.mxu0 0.0
        %721 = vmatpush1.msra.mxu0 0.0
        %722 = vmatprep.subr.mxu0 0.0
        %723 = vmatpush1.msra.mxu0 0.0
        %724 = vmatprep.subr.mxu0 0.0
        %725 = vmatpush1.msra.mxu0 0.0
        %726 = vmatprep.subr.mxu0 0.0
        %727 = vmatpush1.msra.mxu0 0.0
        %728 = vmatprep.subr.mxu0 0.0
        %729 = vmatpush1.msra.mxu0 0.0
        %730 = vmatprep.subr.mxu0 0.0
        %731 = vmatpush1.msra.mxu0 0.0
        %732 = vmatprep.subr.mxu0 0.0
        %733 = vmatpush1.msra.mxu0 0.0
        %734 = vmatprep.subr.mxu0 0.0
        %735 = vmatpush1.msra.mxu0 0.0
        %736 = vmatprep.subr.mxu0 0.0
        %737 = vmatpush1.msra.mxu0 0.0
        %738 = vmatprep.subr.mxu0 0.0
        %739 = vmatpush1.msra.mxu0 0.0
        %740 = vmatprep.subr.mxu0 0.0
        %741 = vmatpush1.msra.mxu0 0.0
        %742 = vmatprep.subr.mxu0 0.0
        %743 = vmatpush1.msra.mxu0 0.0
        %744 = vmatprep.mubr.f32.mxu0 0.0
        %745 = vmatmul.mubr.f32.gmra.mrb[0].mxu0 %v678
        %v746 = vpop.f32.mrb[0].mxu0
        %v747 = vadd.f32 %v674, %v746
        %v748 = vpop.f32.mrb[0].mxu0
        %749 = vdwg.mxu0
        %v751 = vlaneseq
        %v752 = vshrl.u32 %v751, 7
        %v753 = vsub.s32 0, %v752
        %v754 = vrot.slane %v667, %v753
        %v756 = vmul.f32 %v747, %v754
        %v757 = vld [vmem:[%s622] sm:$0xff]
        %v758 = vld [vmem:[%s622 + $0x8] sm:$0xff]
        %v759 = vld [vmem:[%s627] sm:$0xff]
        %v760 = vld [vmem:[%s627 + $0x8] sm:$0xff]
        %762 = vset.pattern.permute.xlu0 0
        %763 = vperm.xlu0 %762, %v759
        %v764 = vpop.permute.xlu0 %763
        %767 = vset.pattern.permute.xlu0 0
        %768 = vperm.xlu0 %767, %v760
        %v769 = vpop.permute.xlu0 %768
        %vm771 = vcmask 31744
        %v773 = vsel %vm771, %v757, 0
        %v776 = vsel %vm771, %v758, 0
        %vm778 = vcmask 1043456
        %v780 = vsel %vm778, %v756, 0
        %782 = vmatprep.subr.mxu0 0.0
        %783 = vmatpush1.msra.mxu0 %v780
        %784 = vmatprep.subr.mxu0 0.0
        %785 = vmatpush1.msra.mxu0 0.0
        %786 = vmatprep.subr.mxu0 0.0
        %787 = vmatpush1.msra.mxu0 0.0
        %788 = vmatprep.subr.mxu0 0.0
        %789 = vmatpush1.msra.mxu0 0.0
        %790 = vmatprep.subr.mxu0 0.0
        %791 = vmatpush1.msra.mxu0 0.0
        %792 = vmatprep.subr.mxu0 0.0
        %793 = vmatpush1.msra.mxu0 0.0
        %794 = vmatprep.subr.mxu0 0.0
        %795 = vmatpush1.msra.mxu0 0.0
        %796 = vmatprep.subr.mxu0 0.0
        %797 = vmatpush1.msra.mxu0 0.0
        %798 = vmatprep.subr.mxu0 0.0
        %799 = vmatpush1.msra.mxu0 0.0
        %800 = vmatprep.subr.mxu0 0.0
        %801 = vmatpush1.msra.mxu0 0.0
        %802 = vmatprep.subr.mxu0 0.0
        %803 = vmatpush1.msra.mxu0 0.0
        %804 = vmatprep.subr.mxu0 0.0
        %805 = vmatpush1.msra.mxu0 0.0
        %806 = vmatprep.subr.mxu0 0.0
        %807 = vmatpush1.msra.mxu0 0.0
        %808 = vmatprep.subr.mxu0 0.0
        %809 = vmatpush1.msra.mxu0 0.0
        %810 = vmatprep.subr.mxu0 0.0
        %811 = vmatpush1.msra.mxu0 0.0
        %812 = vmatprep.subr.mxu0 0.0
        %813 = vmatpush1.msra.mxu0 0.0
        %814 = vmatprep.subr.mxu0 0.0
        %815 = vmatpush1.msra.mxu0 0.0
        %816 = vmatprep.subr.mxu0 0.0
        %817 = vmatpush1.msra.mxu0 0.0
        %818 = vmatprep.subr.mxu0 0.0
        %819 = vmatpush1.msra.mxu0 0.0
        %820 = vmatprep.subr.mxu0 0.0
        %821 = vmatpush1.msra.mxu0 0.0
        %822 = vmatprep.subr.mxu0 0.0
        %823 = vmatpush1.msra.mxu0 0.0
        %824 = vmatprep.subr.mxu0 0.0
        %825 = vmatpush1.msra.mxu0 0.0
        %826 = vmatprep.subr.mxu0 0.0
        %827 = vmatpush1.msra.mxu0 0.0
        %828 = vmatprep.subr.mxu0 0.0
        %829 = vmatpush1.msra.mxu0 0.0
        %830 = vmatprep.subr.mxu0 0.0
        %831 = vmatpush1.msra.mxu0 0.0
        %832 = vmatprep.subr.mxu0 0.0
        %833 = vmatpush1.msra.mxu0 0.0
        %834 = vmatprep.subr.mxu0 0.0
        %835 = vmatpush1.msra.mxu0 0.0
        %836 = vmatprep.subr.mxu0 0.0
        %837 = vmatpush1.msra.mxu0 0.0
        %838 = vmatprep.subr.mxu0 0.0
        %839 = vmatpush1.msra.mxu0 0.0
        %840 = vmatprep.subr.mxu0 0.0
        %841 = vmatpush1.msra.mxu0 0.0
        %842 = vmatprep.subr.mxu0 0.0
        %843 = vmatpush1.msra.mxu0 0.0
        %844 = vmatprep.subr.mxu0 0.0
        %845 = vmatpush1.msra.mxu0 0.0
        %846 = vmatprep.mubr.f32.mxu0 0.0
        %847 = vmatmul.mubr.f32.gmra.mrb[0].mxu0 %v773
        %v848 = vpop.f32.mrb[0].mxu0
        %v849 = vadd.f32 %v764, %v848
        %v850 = vpop.f32.mrb[0].mxu0
        %851 = vmatprep.mubr.f32.mxu0 0.0
        %852 = vmatmul.mubr.f32.gmra.mrb[0].mxu0 %v776
        %v853 = vpop.f32.mrb[0].mxu0
        %v854 = vadd.f32 %v769, %v853
        %v855 = vpop.f32.mrb[0].mxu0
        %856 = vdwg.mxu0
        %v857 = vmul.f32 %v849, %v754
        %v858 = vmul.f32 %v854, %v754
        %859 = vrot.lane.b32.xlu0 %v857, 2
        %v860 = vpop.permute.xlu0 %859
        %861 = vrot.lane.b32.xlu0 %v858, 2
        %v862 = vpop.permute.xlu0 %861
        %v863 = vlaneseq
        %v864 = vand.u32 %v863, 127
        %vm865 = vcmp.ge.s32.totalorder %v864, 2
        %vm866 = vcmp.lt.s32.totalorder %v864, 130
        %vm867 = vmand %vm865, %vm866
        %v868 = vsel %vm867, %v860, 0.0
        %v869 = vsel %vm867, %v862, 0.0
        %870 = vrot.lane.b32.xlu0 %v857, 1
        %v871 = vpop.permute.xlu0 %870
        %872 = vrot.lane.b32.xlu0 %v858, 1
        %v873 = vpop.permute.xlu0 %872
        %vm874 = vcmp.ge.s32.totalorder %v864, 1
        %vm875 = vcmp.lt.s32.totalorder %v864, 129
        %vm876 = vmand %vm874, %vm875
        %v877 = vsel %vm876, %v871, 0.0
        %v878 = vsel %vm876, %v873, 0.0
        %879 = vrot.lane.b32.xlu0 %v857, 127
        %v880 = vpop.permute.xlu0 %879
        %881 = vrot.lane.b32.xlu0 %v858, 127
        %v882 = vpop.permute.xlu0 %881
        %vm883 = vcmp.ge.s32.totalorder %v864, 4294967295
        %vm884 = vcmp.lt.s32.totalorder %v864, 127
        %vm885 = vmand %vm883, %vm884
        %v886 = vsel %vm885, %v880, 0.0
        %v887 = vsel %vm885, %v882, 0.0
        %888 = vrot.lane.b32.xlu0 %v857, 126
        %v889 = vpop.permute.xlu0 %888
        %890 = vrot.lane.b32.xlu0 %v858, 126
        %v891 = vpop.permute.xlu0 %890
        %vm892 = vcmp.ge.s32.totalorder %v864, 4294967294
        %vm893 = vcmp.lt.s32.totalorder %v864, 126
        %vm894 = vmand %vm892, %vm893
        %v895 = vsel %vm894, %v889, 0.0
        %v896 = vsel %vm894, %v891, 0.0
        %v897 = vld [vmem:[%s632] sm:$0xff]
        %v898 = vld [vmem:[%s632 + $0x8] sm:$0xff]
        %v899 = vld [vmem:[%s632 + $0x10] sm:$0xff]
        %v900 = vld [vmem:[%s632 + $0x18] sm:$0xff]
        %v901 = vld [vmem:[%s637] sm:$0xff]
        %v902 = vld [vmem:[%s637 + $0x8] sm:$0xff]
        %v903 = vld [vmem:[%s637 + $0x10] sm:$0xff]
        %v904 = vld [vmem:[%s637 + $0x18] sm:$0xff]
        %906 = vset.pattern.permute.xlu0 0
        %907 = vperm.xlu0 %906, %v901
        %v908 = vpop.permute.xlu0 %907
        %911 = vset.pattern.permute.xlu0 0
        %912 = vperm.xlu0 %911, %v902
        %v913 = vpop.permute.xlu0 %912
        %916 = vset.pattern.permute.xlu0 0
        %917 = vperm.xlu0 %916, %v903
        %v918 = vpop.permute.xlu0 %917
        %921 = vset.pattern.permute.xlu0 0
        %922 = vperm.xlu0 %921, %v904
        %v923 = vpop.permute.xlu0 %922
        %vm925 = vcmask 654336
        %v927 = vsel %vm925, %v897, 0
        %v930 = vsel %vm925, %v898, 0
        %v933 = vsel %vm925, %v899, 0
        %v936 = vsel %vm925, %v900, 0
        %938 = vmatprep.subr.mxu0 0.0
        %939 = vmatpush1.msra.mxu0 %v868
        %940 = vmatprep.subr.mxu0 0.0
        %941 = vmatpush1.msra.mxu0 %v869
        %942 = vmatprep.subr.mxu0 0.0
        %943 = vmatpush1.msra.mxu0 %v877
        %944 = vmatprep.subr.mxu0 0.0
        %945 = vmatpush1.msra.mxu0 %v878
        %946 = vmatprep.subr.mxu0 0.0
        %947 = vmatpush1.msra.mxu0 %v857
        %948 = vmatprep.subr.mxu0 0.0
        %949 = vmatpush1.msra.mxu0 %v858
        %950 = vmatprep.subr.mxu0 0.0
        %951 = vmatpush1.msra.mxu0 %v886
        %952 = vmatprep.subr.mxu0 0.0
        %953 = vmatpush1.msra.mxu0 %v887
        %954 = vmatprep.subr.mxu0 0.0
        %955 = vmatpush1.msra.mxu0 %v895
        %956 = vmatprep.subr.mxu0 0.0
        %957 = vmatpush1.msra.mxu0 %v896
        %958 = vmatprep.subr.mxu0 0.0
        %959 = vmatpush1.msra.mxu0 0.0
        %960 = vmatprep.subr.mxu0 0.0
        %961 = vmatpush1.msra.mxu0 0.0
        %962 = vmatprep.subr.mxu0 0.0
        %963 = vmatpush1.msra.mxu0 0.0
        %964 = vmatprep.subr.mxu0 0.0
        %965 = vmatpush1.msra.mxu0 0.0
        %966 = vmatprep.subr.mxu0 0.0
        %967 = vmatpush1.msra.mxu0 0.0
        %968 = vmatprep.subr.mxu0 0.0
        %969 = vmatpush1.msra.mxu0 0.0
        %970 = vmatprep.subr.mxu0 0.0
        %971 = vmatpush1.msra.mxu0 0.0
        %972 = vmatprep.subr.mxu0 0.0
        %973 = vmatpush1.msra.mxu0 0.0
        %974 = vmatprep.subr.mxu0 0.0
        %975 = vmatpush1.msra.mxu0 0.0
        %976 = vmatprep.subr.mxu0 0.0
        %977 = vmatpush1.msra.mxu0 0.0
        %978 = vmatprep.subr.mxu0 0.0
        %979 = vmatpush1.msra.mxu0 0.0
        %980 = vmatprep.subr.mxu0 0.0
        %981 = vmatpush1.msra.mxu0 0.0
        %982 = vmatprep.subr.mxu0 0.0
        %983 = vmatpush1.msra.mxu0 0.0
        %984 = vmatprep.subr.mxu0 0.0
        %985 = vmatpush1.msra.mxu0 0.0
        %986 = vmatprep.subr.mxu0 0.0
        %987 = vmatpush1.msra.mxu0 0.0
        %988 = vmatprep.subr.mxu0 0.0
        %989 = vmatpush1.msra.mxu0 0.0
        %990 = vmatprep.subr.mxu0 0.0
        %991 = vmatpush1.msra.mxu0 0.0
        %992 = vmatprep.subr.mxu0 0.0
        %993 = vmatpush1.msra.mxu0 0.0
        %994 = vmatprep.subr.mxu0 0.0
        %995 = vmatpush1.msra.mxu0 0.0
        %996 = vmatprep.subr.mxu0 0.0
        %997 = vmatpush1.msra.mxu0 0.0
        %998 = vmatprep.subr.mxu0 0.0
        %999 = vmatpush1.msra.mxu0 0.0
        %1000 = vmatprep.subr.mxu0 0.0
        %1001 = vmatpush1.msra.mxu0 0.0
        %1002 = vmatprep.mubr.f32.mxu0 0.0
        %1003 = vmatmul.mubr.f32.gmra.mrb[0].mxu0 %v927
        %v1004 = vpop.f32.mrb[0].mxu0
        %v1005 = vadd.f32 %v908, %v1004
        %v1006 = vpop.f32.mrb[0].mxu0
        %1007 = vmatprep.mubr.f32.mxu0 0.0
        %1008 = vmatmul.mubr.f32.gmra.mrb[0].mxu0 %v930
        %v1009 = vpop.f32.mrb[0].mxu0
        %v1010 = vadd.f32 %v913, %v1009
        %v1011 = vpop.f32.mrb[0].mxu0
        %1012 = vmatprep.mubr.f32.mxu0 0.0
        %1013 = vmatmul.mubr.f32.gmra.mrb[0].mxu0 %v933
        %v1014 = vpop.f32.mrb[0].mxu0
        %v1015 = vadd.f32 %v918, %v1014
        %v1016 = vpop.f32.mrb[0].mxu0
        %1017 = vmatprep.mubr.f32.mxu0 0.0
        %1018 = vmatmul.mubr.f32.gmra.mrb[0].mxu0 %v936
        %v1019 = vpop.f32.mrb[0].mxu0
        %v1020 = vadd.f32 %v923, %v1019
        %v1021 = vpop.f32.mrb[0].mxu0
        %1022 = vdwg.mxu0
        %v1023 = vtanh.pop %v1005
        %v1024 = vtanh.pop %v1010
        %v1025 = vxor.u32 %v1015, 2147483648
        %v1026 = vxor.u32 %v1020, 2147483648
        %v1027 = vmul.f32 %v1025, 1.442695
        %v1028 = vpow.pop %v1027
        %v1029 = vmul.f32 %v1026, 1.442695
        %v1030 = vpow.pop %v1029
        %v1031 = vadd.f32 %v1028, 1.0
        %v1032 = vadd.f32 %v1030, 1.0
        %v1033 = vrcp.pop %v1031
        %v1034 = vmul.f32 1.0, %v1033
        %v1035 = vrcp.pop %v1032
        %v1036 = vmul.f32 1.0, %v1035
        %v1037 = vmul.f32 %v1023, %v1034
        %v1038 = vmul.f32 %v1024, %v1036
        %v1039 = vld [vmem:[%s642] sm:$0xff]
        %v1040 = vld [vmem:[%s642 + $0x8] sm:$0xff]
        %v1041 = vld [vmem:[%s642 + $0x10] sm:$0xff]
        %v1042 = vld [vmem:[%s642 + $0x18] sm:$0xff]
        %v1043 = vld [vmem:[%s647] sm:$0xff]
        %v1044 = vld [vmem:[%s647 + $0x8] sm:$0xff]
        %v1045 = vld [vmem:[%s647 + $0x10] sm:$0xff]
        %v1046 = vld [vmem:[%s647 + $0x18] sm:$0xff]
        %1048 = vset.pattern.permute.xlu0 0
        %1049 = vperm.xlu0 %1048, %v1043
        %v1050 = vpop.permute.xlu0 %1049
        %1053 = vset.pattern.permute.xlu0 0
        %1054 = vperm.xlu0 %1053, %v1044
        %v1055 = vpop.permute.xlu0 %1054
        %1058 = vset.pattern.permute.xlu0 0
        %1059 = vperm.xlu0 %1058, %v1045
        %v1060 = vpop.permute.xlu0 %1059
        %1063 = vset.pattern.permute.xlu0 0
        %1064 = vperm.xlu0 %1063, %v1046
        %v1065 = vpop.permute.xlu0 %1064
        %vm1067 = vcmask 130048
        %v1069 = vsel %vm1067, %v1039, 0
        %v1072 = vsel %vm1067, %v1040, 0
        %v1075 = vsel %vm1067, %v1041, 0
        %v1078 = vsel %vm1067, %v1042, 0
        %1080 = vmatprep.subr.mxu0 0.0
        %1081 = vmatpush1.msra.mxu0 %v1037
        %1082 = vmatprep.subr.mxu0 0.0
        %1083 = vmatpush1.msra.mxu0 %v1038
        %1084 = vmatprep.subr.mxu0 0.0
        %1085 = vmatpush1.msra.mxu0 0.0
        %1086 = vmatprep.subr.mxu0 0.0
        %1087 = vmatpush1.msra.mxu0 0.0
        %1088 = vmatprep.subr.mxu0 0.0
        %1089 = vmatpush1.msra.mxu0 0.0
        %1090 = vmatprep.subr.mxu0 0.0
        %1091 = vmatpush1.msra.mxu0 0.0
        %1092 = vmatprep.subr.mxu0 0.0
        %1093 = vmatpush1.msra.mxu0 0.0
        %1094 = vmatprep.subr.mxu0 0.0
        %1095 = vmatpush1.msra.mxu0 0.0
        %1096 = vmatprep.subr.mxu0 0.0
        %1097 = vmatpush1.msra.mxu0 0.0
        %1098 = vmatprep.subr.mxu0 0.0
        %1099 = vmatpush1.msra.mxu0 0.0
        %1100 = vmatprep.subr.mxu0 0.0
        %1101 = vmatpush1.msra.mxu0 0.0
        %1102 = vmatprep.subr.mxu0 0.0
        %1103 = vmatpush1.msra.mxu0 0.0
        %1104 = vmatprep.subr.mxu0 0.0
        %1105 = vmatpush1.msra.mxu0 0.0
        %1106 = vmatprep.subr.mxu0 0.0
        %1107 = vmatpush1.msra.mxu0 0.0
        %1108 = vmatprep.subr.mxu0 0.0
        %1109 = vmatpush1.msra.mxu0 0.0
        %1110 = vmatprep.subr.mxu0 0.0
        %1111 = vmatpush1.msra.mxu0 0.0
        %1112 = vmatprep.subr.mxu0 0.0
        %1113 = vmatpush1.msra.mxu0 0.0
        %1114 = vmatprep.subr.mxu0 0.0
        %1115 = vmatpush1.msra.mxu0 0.0
        %1116 = vmatprep.subr.mxu0 0.0
        %1117 = vmatpush1.msra.mxu0 0.0
        %1118 = vmatprep.subr.mxu0 0.0
        %1119 = vmatpush1.msra.mxu0 0.0
        %1120 = vmatprep.subr.mxu0 0.0
        %1121 = vmatpush1.msra.mxu0 0.0
        %1122 = vmatprep.subr.mxu0 0.0
        %1123 = vmatpush1.msra.mxu0 0.0
        %1124 = vmatprep.subr.mxu0 0.0
        %1125 = vmatpush1.msra.mxu0 0.0
        %1126 = vmatprep.subr.mxu0 0.0
        %1127 = vmatpush1.msra.mxu0 0.0
        %1128 = vmatprep.subr.mxu0 0.0
        %1129 = vmatpush1.msra.mxu0 0.0
        %1130 = vmatprep.subr.mxu0 0.0
        %1131 = vmatpush1.msra.mxu0 0.0
        %1132 = vmatprep.subr.mxu0 0.0
        %1133 = vmatpush1.msra.mxu0 0.0
        %1134 = vmatprep.subr.mxu0 0.0
        %1135 = vmatpush1.msra.mxu0 0.0
        %1136 = vmatprep.subr.mxu0 0.0
        %1137 = vmatpush1.msra.mxu0 0.0
        %1138 = vmatprep.subr.mxu0 0.0
        %1139 = vmatpush1.msra.mxu0 0.0
        %1140 = vmatprep.subr.mxu0 0.0
        %1141 = vmatpush1.msra.mxu0 0.0
        %1142 = vmatprep.subr.mxu0 0.0
        %1143 = vmatpush1.msra.mxu0 0.0
        %1144 = vmatprep.mubr.f32.mxu0 0.0
        %1145 = vmatmul.mubr.f32.gmra.mrb[0].mxu0 %v1069
        %v1146 = vpop.f32.mrb[0].mxu0
        %v1147 = vadd.f32 %v1050, %v1146
        %v1148 = vpop.f32.mrb[0].mxu0
        %1149 = vmatprep.mubr.f32.mxu0 0.0
        %1150 = vmatmul.mubr.f32.gmra.mrb[0].mxu0 %v1072
        %v1151 = vpop.f32.mrb[0].mxu0
        %v1152 = vadd.f32 %v1055, %v1151
        %v1153 = vpop.f32.mrb[0].mxu0
        %1154 = vmatprep.mubr.f32.mxu0 0.0
        %1155 = vmatmul.mubr.f32.gmra.mrb[0].mxu0 %v1075
        %v1156 = vpop.f32.mrb[0].mxu0
        %v1157 = vadd.f32 %v1060, %v1156
        %v1158 = vpop.f32.mrb[0].mxu0
        %1159 = vmatprep.mubr.f32.mxu0 0.0
        %1160 = vmatmul.mubr.f32.gmra.mrb[0].mxu0 %v1078
        %v1161 = vpop.f32.mrb[0].mxu0
        %v1162 = vadd.f32 %v1065, %v1161
        %v1163 = vpop.f32.mrb[0].mxu0
        %1164 = vdwg.mxu0
        %v1165 = vadd.f32 %v857, %v1147
        %v1166 = vadd.f32 %v858, %v1152
        %v1167 = vmul.f32 %v1165, %v754
        %v1168 = vmul.f32 %v1166, %v754
        %1169 = vrot.lane.b32.xlu0 %v1167, 4
        %v1170 = vpop.permute.xlu0 %1169
        %1171 = vrot.lane.b32.xlu0 %v1168, 4
        %v1172 = vpop.permute.xlu0 %1171
        %vm1173 = vcmp.ge.s32.totalorder %v864, 4
        %vm1174 = vcmp.lt.s32.totalorder %v864, 132
        %vm1175 = vmand %vm1173, %vm1174
        %v1176 = vsel %vm1175, %v1170, 0.0
        %v1177 = vsel %vm1175, %v1172, 0.0
        %1178 = vrot.lane.b32.xlu0 %v1167, 2
        %v1179 = vpop.permute.xlu0 %1178
        %1180 = vrot.lane.b32.xlu0 %v1168, 2
        %v1181 = vpop.permute.xlu0 %1180
        %v1182 = vsel %vm867, %v1179, 0.0
        %v1183 = vsel %vm867, %v1181, 0.0
        %1184 = vrot.lane.b32.xlu0 %v1167, 126
        %v1185 = vpop.permute.xlu0 %1184
        %1186 = vrot.lane.b32.xlu0 %v1168, 126
        %v1187 = vpop.permute.xlu0 %1186
        %v1188 = vsel %vm894, %v1185, 0.0
        %v1189 = vsel %vm894, %v1187, 0.0
        %1190 = vrot.lane.b32.xlu0 %v1167, 124
        %v1191 = vpop.permute.xlu0 %1190
        %1192 = vrot.lane.b32.xlu0 %v1168, 124
        %v1193 = vpop.permute.xlu0 %1192
        %vm1194 = vcmp.ge.s32.totalorder %v864, 4294967292
        %vm1195 = vcmp.lt.s32.totalorder %v864, 124
        %vm1196 = vmand %vm1194, %vm1195
        %v1197 = vsel %vm1196, %v1191, 0.0
        %v1198 = vsel %vm1196, %v1193, 0.0
        %s1199 = scalar_lea.vmem %s632, 32
        %v1200 = vld [vmem:[%s1199] sm:$0xff]
        %v1201 = vld [vmem:[%s1199 + $0x8] sm:$0xff]
        %v1202 = vld [vmem:[%s1199 + $0x10] sm:$0xff]
        %v1203 = vld [vmem:[%s1199 + $0x18] sm:$0xff]
        %s1204 = scalar_lea.vmem %s637, 32
        %v1205 = vld [vmem:[%s1204] sm:$0xff]
        %v1206 = vld [vmem:[%s1204 + $0x8] sm:$0xff]
        %v1207 = vld [vmem:[%s1204 + $0x10] sm:$0xff]
        %v1208 = vld [vmem:[%s1204 + $0x18] sm:$0xff]
        %1210 = vset.pattern.permute.xlu0 0
        %1211 = vperm.xlu0 %1210, %v1205
        %v1212 = vpop.permute.xlu0 %1211
        %1215 = vset.pattern.permute.xlu0 0
        %1216 = vperm.xlu0 %1215, %v1206
        %v1217 = vpop.permute.xlu0 %1216
        %1220 = vset.pattern.permute.xlu0 0
        %1221 = vperm.xlu0 %1220, %v1207
        %v1222 = vpop.permute.xlu0 %1221
        %1225 = vset.pattern.permute.xlu0 0
        %1226 = vperm.xlu0 %1225, %v1208
        %v1227 = vpop.permute.xlu0 %1226
        %v1230 = vsel %vm925, %v1200, 0
        %v1233 = vsel %vm925, %v1201, 0
        %v1236 = vsel %vm925, %v1202, 0
        %v1239 = vsel %vm925, %v1203, 0
        %1241 = vmatprep.subr.mxu0 0.0
        %1242 = vmatpush1.msra.mxu0 %v1176
        %1243 = vmatprep.subr.mxu0 0.0
        %1244 = vmatpush1.msra.mxu0 %v1177
        %1245 = vmatprep.subr.mxu0 0.0
        %1246 = vmatpush1.msra.mxu0 %v1182
        %1247 = vmatprep.subr.mxu0 0.0
        %1248 = vmatpush1.msra.mxu0 %v1183
        %1249 = vmatprep.subr.mxu0 0.0
        %1250 = vmatpush1.msra.mxu0 %v1167
        %1251 = vmatprep.subr.mxu0 0.0
        %1252 = vmatpush1.msra.mxu0 %v1168
        %1253 = vmatprep.subr.mxu0 0.0
        %1254 = vmatpush1.msra.mxu0 %v1188
        %1255 = vmatprep.subr.mxu0 0.0
        %1256 = vmatpush1.msra.mxu0 %v1189
        %1257 = vmatprep.subr.mxu0 0.0
        %1258 = vmatpush1.msra.mxu0 %v1197
        %1259 = vmatprep.subr.mxu0 0.0
        %1260 = vmatpush1.msra.mxu0 %v1198
        %1261 = vmatprep.subr.mxu0 0.0
        %1262 = vmatpush1.msra.mxu0 0.0
        %1263 = vmatprep.subr.mxu0 0.0
        %1264 = vmatpush1.msra.mxu0 0.0
        %1265 = vmatprep.subr.mxu0 0.0
        %1266 = vmatpush1.msra.mxu0 0.0
        %1267 = vmatprep.subr.mxu0 0.0
        %1268 = vmatpush1.msra.mxu0 0.0
        %1269 = vmatprep.subr.mxu0 0.0
        %1270 = vmatpush1.msra.mxu0 0.0
        %1271 = vmatprep.subr.mxu0 0.0
        %1272 = vmatpush1.msra.mxu0 0.0
        %1273 = vmatprep.subr.mxu0 0.0
        %1274 = vmatpush1.msra.mxu0 0.0
        %1275 = vmatprep.subr.mxu0 0.0
        %1276 = vmatpush1.msra.mxu0 0.0
        %1277 = vmatprep.subr.mxu0 0.0
        %1278 = vmatpush1.msra.mxu0 0.0
        %1279 = vmatprep.subr.mxu0 0.0
        %1280 = vmatpush1.msra.mxu0 0.0
        %1281 = vmatprep.subr.mxu0 0.0
        %1282 = vmatpush1.msra.mxu0 0.0
        %1283 = vmatprep.subr.mxu0 0.0
        %1284 = vmatpush1.msra.mxu0 0.0
        %1285 = vmatprep.subr.mxu0 0.0
        %1286 = vmatpush1.msra.mxu0 0.0
        %1287 = vmatprep.subr.mxu0 0.0
        %1288 = vmatpush1.msra.mxu0 0.0
        %1289 = vmatprep.subr.mxu0 0.0
        %1290 = vmatpush1.msra.mxu0 0.0
        %1291 = vmatprep.subr.mxu0 0.0
        %1292 = vmatpush1.msra.mxu0 0.0
        %1293 = vmatprep.subr.mxu0 0.0
        %1294 = vmatpush1.msra.mxu0 0.0
        %1295 = vmatprep.subr.mxu0 0.0
        %1296 = vmatpush1.msra.mxu0 0.0
        %1297 = vmatprep.subr.mxu0 0.0
        %1298 = vmatpush1.msra.mxu0 0.0
        %1299 = vmatprep.subr.mxu0 0.0
        %1300 = vmatpush1.msra.mxu0 0.0
        %1301 = vmatprep.subr.mxu0 0.0
        %1302 = vmatpush1.msra.mxu0 0.0
        %1303 = vmatprep.subr.mxu0 0.0
        %1304 = vmatpush1.msra.mxu0 0.0
        %1305 = vmatprep.mubr.f32.mxu0 0.0
        %1306 = vmatmul.mubr.f32.gmra.mrb[0].mxu0 %v1230
        %v1307 = vpop.f32.mrb[0].mxu0
        %v1308 = vadd.f32 %v1212, %v1307
        %v1309 = vpop.f32.mrb[0].mxu0
        %1310 = vmatprep.mubr.f32.mxu0 0.0
        %1311 = vmatmul.mubr.f32.gmra.mrb[0].mxu0 %v1233
        %v1312 = vpop.f32.mrb[0].mxu0
        %v1313 = vadd.f32 %v1217, %v1312
        %v1314 = vpop.f32.mrb[0].mxu0
        %1315 = vmatprep.mubr.f32.mxu0 0.0
        %1316 = vmatmul.mubr.f32.gmra.mrb[0].mxu0 %v1236
        %v1317 = vpop.f32.mrb[0].mxu0
        %v1318 = vadd.f32 %v1222, %v1317
        %v1319 = vpop.f32.mrb[0].mxu0
        %1320 = vmatprep.mubr.f32.mxu0 0.0
        %1321 = vmatmul.mubr.f32.gmra.mrb[0].mxu0 %v1239
        %v1322 = vpop.f32.mrb[0].mxu0
        %v1323 = vadd.f32 %v1227, %v1322
        %v1324 = vpop.f32.mrb[0].mxu0
        %1325 = vdwg.mxu0
        %v1326 = vtanh.pop %v1308
        %v1327 = vtanh.pop %v1313
        %v1328 = vxor.u32 %v1318, 2147483648
        %v1329 = vxor.u32 %v1323, 2147483648
        %v1330 = vmul.f32 %v1328, 1.442695
        %v1331 = vpow.pop %v1330
        %v1332 = vmul.f32 %v1329, 1.442695
        %v1333 = vpow.pop %v1332
        %v1334 = vadd.f32 %v1331, 1.0
        %v1335 = vadd.f32 %v1333, 1.0
        %v1336 = vrcp.pop %v1334
        %v1337 = vmul.f32 1.0, %v1336
        %v1338 = vrcp.pop %v1335
        %v1339 = vmul.f32 1.0, %v1338
        %v1340 = vmul.f32 %v1326, %v1337
        %v1341 = vmul.f32 %v1327, %v1339
        %s1342 = scalar_lea.vmem %s642, 32
        %v1343 = vld [vmem:[%s1342] sm:$0xff]
        %v1344 = vld [vmem:[%s1342 + $0x8] sm:$0xff]
        %v1345 = vld [vmem:[%s1342 + $0x10] sm:$0xff]
        %v1346 = vld [vmem:[%s1342 + $0x18] sm:$0xff]
        %s1347 = scalar_lea.vmem %s647, 32
        %v1348 = vld [vmem:[%s1347] sm:$0xff]
        %v1349 = vld [vmem:[%s1347 + $0x8] sm:$0xff]
        %v1350 = vld [vmem:[%s1347 + $0x10] sm:$0xff]
        %v1351 = vld [vmem:[%s1347 + $0x18] sm:$0xff]
        %1353 = vset.pattern.permute.xlu0 0
        %1354 = vperm.xlu0 %1353, %v1348
        %v1355 = vpop.permute.xlu0 %1354
        %1358 = vset.pattern.permute.xlu0 0
        %1359 = vperm.xlu0 %1358, %v1349
        %v1360 = vpop.permute.xlu0 %1359
        %1363 = vset.pattern.permute.xlu0 0
        %1364 = vperm.xlu0 %1363, %v1350
        %v1365 = vpop.permute.xlu0 %1364
        %1368 = vset.pattern.permute.xlu0 0
        %1369 = vperm.xlu0 %1368, %v1351
        %v1370 = vpop.permute.xlu0 %1369
        %v1373 = vsel %vm1067, %v1343, 0
        %v1376 = vsel %vm1067, %v1344, 0
        %v1379 = vsel %vm1067, %v1345, 0
        %v1382 = vsel %vm1067, %v1346, 0
        %1384 = vmatprep.subr.mxu0 0.0
        %1385 = vmatpush1.msra.mxu0 %v1340
        %1386 = vmatprep.subr.mxu0 0.0
        %1387 = vmatpush1.msra.mxu0 %v1341
        %1388 = vmatprep.subr.mxu0 0.0
        %1389 = vmatpush1.msra.mxu0 0.0
        %1390 = vmatprep.subr.mxu0 0.0
        %1391 = vmatpush1.msra.mxu0 0.0
        %1392 = vmatprep.subr.mxu0 0.0
        %1393 = vmatpush1.msra.mxu0 0.0
        %1394 = vmatprep.subr.mxu0 0.0
        %1395 = vmatpush1.msra.mxu0 0.0
        %1396 = vmatprep.subr.mxu0 0.0
        %1397 = vmatpush1.msra.mxu0 0.0
        %1398 = vmatprep.subr.mxu0 0.0
        %1399 = vmatpush1.msra.mxu0 0.0
        %1400 = vmatprep.subr.mxu0 0.0
        %1401 = vmatpush1.msra.mxu0 0.0
        %1402 = vmatprep.subr.mxu0 0.0
        %1403 = vmatpush1.msra.mxu0 0.0
        %1404 = vmatprep.subr.mxu0 0.0
        %1405 = vmatpush1.msra.mxu0 0.0
        %1406 = vmatprep.subr.mxu0 0.0
        %1407 = vmatpush1.msra.mxu0 0.0
        %1408 = vmatprep.subr.mxu0 0.0
        %1409 = vmatpush1.msra.mxu0 0.0
        %1410 = vmatprep.subr.mxu0 0.0
        %1411 = vmatpush1.msra.mxu0 0.0
        %1412 = vmatprep.subr.mxu0 0.0
        %1413 = vmatpush1.msra.mxu0 0.0
        %1414 = vmatprep.subr.mxu0 0.0
        %1415 = vmatpush1.msra.mxu0 0.0
        %1416 = vmatprep.subr.mxu0 0.0
        %1417 = vmatpush1.msra.mxu0 0.0
        %1418 = vmatprep.subr.mxu0 0.0
        %1419 = vmatpush1.msra.mxu0 0.0
        %1420 = vmatprep.subr.mxu0 0.0
        %1421 = vmatpush1.msra.mxu0 0.0
        %1422 = vmatprep.subr.mxu0 0.0
        %1423 = vmatpush1.msra.mxu0 0.0
        %1424 = vmatprep.subr.mxu0 0.0
        %1425 = vmatpush1.msra.mxu0 0.0
        %1426 = vmatprep.subr.mxu0 0.0
        %1427 = vmatpush1.msra.mxu0 0.0
        %1428 = vmatprep.subr.mxu0 0.0
        %1429 = vmatpush1.msra.mxu0 0.0
        %1430 = vmatprep.subr.mxu0 0.0
        %1431 = vmatpush1.msra.mxu0 0.0
        %1432 = vmatprep.subr.mxu0 0.0
        %1433 = vmatpush1.msra.mxu0 0.0
        %1434 = vmatprep.subr.mxu0 0.0
        %1435 = vmatpush1.msra.mxu0 0.0
        %1436 = vmatprep.subr.mxu0 0.0
        %1437 = vmatpush1.msra.mxu0 0.0
        %1438 = vmatprep.subr.mxu0 0.0
        %1439 = vmatpush1.msra.mxu0 0.0
        %1440 = vmatprep.subr.mxu0 0.0
        %1441 = vmatpush1.msra.mxu0 0.0
        %1442 = vmatprep.subr.mxu0 0.0
        %1443 = vmatpush1.msra.mxu0 0.0
        %1444 = vmatprep.subr.mxu0 0.0
        %1445 = vmatpush1.msra.mxu0 0.0
        %1446 = vmatprep.subr.mxu0 0.0
        %1447 = vmatpush1.msra.mxu0 0.0
        %1448 = vmatprep.mubr.f32.mxu0 0.0
        %1449 = vmatmul.mubr.f32.gmra.mrb[0].mxu0 %v1373
        %v1450 = vpop.f32.mrb[0].mxu0
        %v1451 = vadd.f32 %v1355, %v1450
        %v1452 = vpop.f32.mrb[0].mxu0
        %1453 = vmatprep.mubr.f32.mxu0 0.0
        %1454 = vmatmul.mubr.f32.gmra.mrb[0].mxu0 %v1376
        %v1455 = vpop.f32.mrb[0].mxu0
        %v1456 = vadd.f32 %v1360, %v1455
        %v1457 = vpop.f32.mrb[0].mxu0
        %1458 = vmatprep.mubr.f32.mxu0 0.0
        %1459 = vmatmul.mubr.f32.gmra.mrb[0].mxu0 %v1379
        %v1460 = vpop.f32.mrb[0].mxu0
        %v1461 = vadd.f32 %v1365, %v1460
        %v1462 = vpop.f32.mrb[0].mxu0
        %1463 = vmatprep.mubr.f32.mxu0 0.0
        %1464 = vmatmul.mubr.f32.gmra.mrb[0].mxu0 %v1382
        %v1465 = vpop.f32.mrb[0].mxu0
        %v1466 = vadd.f32 %v1370, %v1465
        %v1467 = vpop.f32.mrb[0].mxu0
        %1468 = vdwg.mxu0
        %v1469 = vadd.f32 %v1167, %v1451
        %v1470 = vadd.f32 %v1168, %v1456
        %v1471 = vmul.f32 %v1469, %v754
        %v1472 = vmul.f32 %v1470, %v754
        %v1473 = vadd.f32 %v1157, %v1461
        %v1474 = vadd.f32 %v1162, %v1466
        %1475 = vrot.lane.b32.xlu0 %v1471, 8
        %v1476 = vpop.permute.xlu0 %1475
        %1477 = vrot.lane.b32.xlu0 %v1472, 8
        %v1478 = vpop.permute.xlu0 %1477
        %vm1479 = vcmp.ge.s32.totalorder %v864, 8
        %vm1480 = vcmp.lt.s32.totalorder %v864, 136
        %vm1481 = vmand %vm1479, %vm1480
        %v1482 = vsel %vm1481, %v1476, 0.0
        %v1483 = vsel %vm1481, %v1478, 0.0
        %1484 = vrot.lane.b32.xlu0 %v1471, 4
        %v1485 = vpop.permute.xlu0 %1484
        %1486 = vrot.lane.b32.xlu0 %v1472, 4
        %v1487 = vpop.permute.xlu0 %1486
        %v1488 = vsel %vm1175, %v1485, 0.0
        %v1489 = vsel %vm1175, %v1487, 0.0
        %1490 = vrot.lane.b32.xlu0 %v1471, 124
        %v1491 = vpop.permute.xlu0 %1490
        %1492 = vrot.lane.b32.xlu0 %v1472, 124
        %v1493 = vpop.permute.xlu0 %1492
        %v1494 = vsel %vm1196, %v1491, 0.0
        %v1495 = vsel %vm1196, %v1493, 0.0
        %1496 = vrot.lane.b32.xlu0 %v1471, 120
        %v1497 = vpop.permute.xlu0 %1496
        %1498 = vrot.lane.b32.xlu0 %v1472, 120
        %v1499 = vpop.permute.xlu0 %1498
        %vm1500 = vcmp.ge.s32.totalorder %v864, 4294967288
        %vm1501 = vcmp.lt.s32.totalorder %v864, 120
        %vm1502 = vmand %vm1500, %vm1501
        %v1503 = vsel %vm1502, %v1497, 0.0
        %v1504 = vsel %vm1502, %v1499, 0.0
        %s1505 = scalar_lea.vmem %s632, 64
        %v1506 = vld [vmem:[%s1505] sm:$0xff]
        %v1507 = vld [vmem:[%s1505 + $0x8] sm:$0xff]
        %v1508 = vld [vmem:[%s1505 + $0x10] sm:$0xff]
        %v1509 = vld [vmem:[%s1505 + $0x18] sm:$0xff]
        %s1510 = scalar_lea.vmem %s637, 64
        %v1511 = vld [vmem:[%s1510] sm:$0xff]
        %v1512 = vld [vmem:[%s1510 + $0x8] sm:$0xff]
        %v1513 = vld [vmem:[%s1510 + $0x10] sm:$0xff]
        %v1514 = vld [vmem:[%s1510 + $0x18] sm:$0xff]
        %1516 = vset.pattern.permute.xlu0 0
        %1517 = vperm.xlu0 %1516, %v1511
        %v1518 = vpop.permute.xlu0 %1517
        %1521 = vset.pattern.permute.xlu0 0
        %1522 = vperm.xlu0 %1521, %v1512
        %v1523 = vpop.permute.xlu0 %1522
        %1526 = vset.pattern.permute.xlu0 0
        %1527 = vperm.xlu0 %1526, %v1513
        %v1528 = vpop.permute.xlu0 %1527
        %1531 = vset.pattern.permute.xlu0 0
        %1532 = vperm.xlu0 %1531, %v1514
        %v1533 = vpop.permute.xlu0 %1532
        %v1536 = vsel %vm925, %v1506, 0
        %v1539 = vsel %vm925, %v1507, 0
        %v1542 = vsel %vm925, %v1508, 0
        %v1545 = vsel %vm925, %v1509, 0
        %1547 = vmatprep.subr.mxu0 0.0
        %1548 = vmatpush1.msra.mxu0 %v1482
        %1549 = vmatprep.subr.mxu0 0.0
        %1550 = vmatpush1.msra.mxu0 %v1483
        %1551 = vmatprep.subr.mxu0 0.0
        %1552 = vmatpush1.msra.mxu0 %v1488
        %1553 = vmatprep.subr.mxu0 0.0
        %1554 = vmatpush1.msra.mxu0 %v1489
        %1555 = vmatprep.subr.mxu0 0.0
        %1556 = vmatpush1.msra.mxu0 %v1471
        %1557 = vmatprep.subr.mxu0 0.0
        %1558 = vmatpush1.msra.mxu0 %v1472
        %1559 = vmatprep.subr.mxu0 0.0
        %1560 = vmatpush1.msra.mxu0 %v1494
        %1561 = vmatprep.subr.mxu0 0.0
        %1562 = vmatpush1.msra.mxu0 %v1495
        %1563 = vmatprep.subr.mxu0 0.0
        %1564 = vmatpush1.msra.mxu0 %v1503
        %1565 = vmatprep.subr.mxu0 0.0
        %1566 = vmatpush1.msra.mxu0 %v1504
        %1567 = vmatprep.subr.mxu0 0.0
        %1568 = vmatpush1.msra.mxu0 0.0
        %1569 = vmatprep.subr.mxu0 0.0
        %1570 = vmatpush1.msra.mxu0 0.0
        %1571 = vmatprep.subr.mxu0 0.0
        %1572 = vmatpush1.msra.mxu0 0.0
        %1573 = vmatprep.subr.mxu0 0.0
        %1574 = vmatpush1.msra.mxu0 0.0
        %1575 = vmatprep.subr.mxu0 0.0
        %1576 = vmatpush1.msra.mxu0 0.0
        %1577 = vmatprep.subr.mxu0 0.0
        %1578 = vmatpush1.msra.mxu0 0.0
        %1579 = vmatprep.subr.mxu0 0.0
        %1580 = vmatpush1.msra.mxu0 0.0
        %1581 = vmatprep.subr.mxu0 0.0
        %1582 = vmatpush1.msra.mxu0 0.0
        %1583 = vmatprep.subr.mxu0 0.0
        %1584 = vmatpush1.msra.mxu0 0.0
        %1585 = vmatprep.subr.mxu0 0.0
        %1586 = vmatpush1.msra.mxu0 0.0
        %1587 = vmatprep.subr.mxu0 0.0
        %1588 = vmatpush1.msra.mxu0 0.0
        %1589 = vmatprep.subr.mxu0 0.0
        %1590 = vmatpush1.msra.mxu0 0.0
        %1591 = vmatprep.subr.mxu0 0.0
        %1592 = vmatpush1.msra.mxu0 0.0
        %1593 = vmatprep.subr.mxu0 0.0
        %1594 = vmatpush1.msra.mxu0 0.0
        %1595 = vmatprep.subr.mxu0 0.0
        %1596 = vmatpush1.msra.mxu0 0.0
        %1597 = vmatprep.subr.mxu0 0.0
        %1598 = vmatpush1.msra.mxu0 0.0
        %1599 = vmatprep.subr.mxu0 0.0
        %1600 = vmatpush1.msra.mxu0 0.0
        %1601 = vmatprep.subr.mxu0 0.0
        %1602 = vmatpush1.msra.mxu0 0.0
        %1603 = vmatprep.subr.mxu0 0.0
        %1604 = vmatpush1.msra.mxu0 0.0
        %1605 = vmatprep.subr.mxu0 0.0
        %1606 = vmatpush1.msra.mxu0 0.0
        %1607 = vmatprep.subr.mxu0 0.0
        %1608 = vmatpush1.msra.mxu0 0.0
        %1609 = vmatprep.subr.mxu0 0.0
        %1610 = vmatpush1.msra.mxu0 0.0
        %1611 = vmatprep.mubr.f32.mxu0 0.0
        %1612 = vmatmul.mubr.f32.gmra.mrb[0].mxu0 %v1536
        %v1613 = vpop.f32.mrb[0].mxu0
        %v1614 = vadd.f32 %v1518, %v1613
        %v1615 = vpop.f32.mrb[0].mxu0
        %1616 = vmatprep.mubr.f32.mxu0 0.0
        %1617 = vmatmul.mubr.f32.gmra.mrb[0].mxu0 %v1539
        %v1618 = vpop.f32.mrb[0].mxu0
        %v1619 = vadd.f32 %v1523, %v1618
        %v1620 = vpop.f32.mrb[0].mxu0
        %1621 = vmatprep.mubr.f32.mxu0 0.0
        %1622 = vmatmul.mubr.f32.gmra.mrb[0].mxu0 %v1542
        %v1623 = vpop.f32.mrb[0].mxu0
        %v1624 = vadd.f32 %v1528, %v1623
        %v1625 = vpop.f32.mrb[0].mxu0
        %1626 = vmatprep.mubr.f32.mxu0 0.0
        %1627 = vmatmul.mubr.f32.gmra.mrb[0].mxu0 %v1545
        %v1628 = vpop.f32.mrb[0].mxu0
        %v1629 = vadd.f32 %v1533, %v1628
        %v1630 = vpop.f32.mrb[0].mxu0
        %1631 = vdwg.mxu0
        %v1632 = vtanh.pop %v1614
        %v1633 = vtanh.pop %v1619
        %v1634 = vxor.u32 %v1624, 2147483648
        %v1635 = vxor.u32 %v1629, 2147483648
        %v1636 = vmul.f32 %v1634, 1.442695
        %v1637 = vpow.pop %v1636
        %v1638 = vmul.f32 %v1635, 1.442695
        %v1639 = vpow.pop %v1638
        %v1640 = vadd.f32 %v1637, 1.0
        %v1641 = vadd.f32 %v1639, 1.0
        %v1642 = vrcp.pop %v1640
        %v1643 = vmul.f32 1.0, %v1642
        %v1644 = vrcp.pop %v1641
        %v1645 = vmul.f32 1.0, %v1644
        %v1646 = vmul.f32 %v1632, %v1643
        %v1647 = vmul.f32 %v1633, %v1645
        %s1648 = scalar_lea.vmem %s642, 64
        %v1649 = vld [vmem:[%s1648 + $0x10] sm:$0xff]
        %v1650 = vld [vmem:[%s1648 + $0x18] sm:$0xff]
        %s1651 = scalar_lea.vmem %s647, 64
        %v1652 = vld [vmem:[%s1651 + $0x10] sm:$0xff]
        %v1653 = vld [vmem:[%s1651 + $0x18] sm:$0xff]
        %1655 = vset.pattern.permute.xlu0 0
        %1656 = vperm.xlu0 %1655, %v1652
        %v1657 = vpop.permute.xlu0 %1656
        %1660 = vset.pattern.permute.xlu0 0
        %1661 = vperm.xlu0 %1660, %v1653
        %v1662 = vpop.permute.xlu0 %1661
        %v1665 = vsel %vm1067, %v1649, 0
        %v1668 = vsel %vm1067, %v1650, 0
        %1670 = vmatprep.subr.mxu0 0.0
        %1671 = vmatpush1.msra.mxu0 %v1646
        %1672 = vmatprep.subr.mxu0 0.0
        %1673 = vmatpush1.msra.mxu0 %v1647
        %1674 = vmatprep.subr.mxu0 0.0
        %1675 = vmatpush1.msra.mxu0 0.0
        %1676 = vmatprep.subr.mxu0 0.0
        %1677 = vmatpush1.msra.mxu0 0.0
        %1678 = vmatprep.subr.mxu0 0.0
        %1679 = vmatpush1.msra.mxu0 0.0
        %1680 = vmatprep.subr.mxu0 0.0
        %1681 = vmatpush1.msra.mxu0 0.0
        %1682 = vmatprep.subr.mxu0 0.0
        %1683 = vmatpush1.msra.mxu0 0.0
        %1684 = vmatprep.subr.mxu0 0.0
        %1685 = vmatpush1.msra.mxu0 0.0
        %1686 = vmatprep.subr.mxu0 0.0
        %1687 = vmatpush1.msra.mxu0 0.0
        %1688 = vmatprep.subr.mxu0 0.0
        %1689 = vmatpush1.msra.mxu0 0.0
        %1690 = vmatprep.subr.mxu0 0.0
        %1691 = vmatpush1.msra.mxu0 0.0
        %1692 = vmatprep.subr.mxu0 0.0
        %1693 = vmatpush1.msra.mxu0 0.0
        %1694 = vmatprep.subr.mxu0 0.0
        %1695 = vmatpush1.msra.mxu0 0.0
        %1696 = vmatprep.subr.mxu0 0.0
        %1697 = vmatpush1.msra.mxu0 0.0
        %1698 = vmatprep.subr.mxu0 0.0
        %1699 = vmatpush1.msra.mxu0 0.0
        %1700 = vmatprep.subr.mxu0 0.0
        %1701 = vmatpush1.msra.mxu0 0.0
        %1702 = vmatprep.subr.mxu0 0.0
        %1703 = vmatpush1.msra.mxu0 0.0
        %1704 = vmatprep.subr.mxu0 0.0
        %1705 = vmatpush1.msra.mxu0 0.0
        %1706 = vmatprep.subr.mxu0 0.0
        %1707 = vmatpush1.msra.mxu0 0.0
        %1708 = vmatprep.subr.mxu0 0.0
        %1709 = vmatpush1.msra.mxu0 0.0
        %1710 = vmatprep.subr.mxu0 0.0
        %1711 = vmatpush1.msra.mxu0 0.0
        %1712 = vmatprep.subr.mxu0 0.0
        %1713 = vmatpush1.msra.mxu0 0.0
        %1714 = vmatprep.subr.mxu0 0.0
        %1715 = vmatpush1.msra.mxu0 0.0
        %1716 = vmatprep.subr.mxu0 0.0
        %1717 = vmatpush1.msra.mxu0 0.0
        %1718 = vmatprep.subr.mxu0 0.0
        %1719 = vmatpush1.msra.mxu0 0.0
        %1720 = vmatprep.subr.mxu0 0.0
        %1721 = vmatpush1.msra.mxu0 0.0
        %1722 = vmatprep.subr.mxu0 0.0
        %1723 = vmatpush1.msra.mxu0 0.0
        %1724 = vmatprep.subr.mxu0 0.0
        %1725 = vmatpush1.msra.mxu0 0.0
        %1726 = vmatprep.subr.mxu0 0.0
        %1727 = vmatpush1.msra.mxu0 0.0
        %1728 = vmatprep.subr.mxu0 0.0
        %1729 = vmatpush1.msra.mxu0 0.0
        %1730 = vmatprep.subr.mxu0 0.0
        %1731 = vmatpush1.msra.mxu0 0.0
        %1732 = vmatprep.subr.mxu0 0.0
        %1733 = vmatpush1.msra.mxu0 0.0
        %1734 = vmatprep.mubr.f32.mxu0 0.0
        %1735 = vmatmul.mubr.f32.gmra.mrb[0].mxu0 %v1665
        %v1736 = vpop.f32.mrb[0].mxu0
        %v1737 = vadd.f32 %v1657, %v1736
        %v1738 = vpop.f32.mrb[0].mxu0
        %1739 = vmatprep.mubr.f32.mxu0 0.0
        %1740 = vmatmul.mubr.f32.gmra.mrb[0].mxu0 %v1668
        %v1741 = vpop.f32.mrb[0].mxu0
        %v1742 = vadd.f32 %v1662, %v1741
        %v1743 = vpop.f32.mrb[0].mxu0
        %1744 = vdwg.mxu0
        %v1745 = vadd.f32 %v1473, %v1737
        %v1746 = vadd.f32 %v1474, %v1742
        %v1747 = vmul.f32 %v1745, %v754
        %v1748 = vmul.f32 %v1746, %v754
        %v1749 = vld [vmem:[%s651] sm:$0xff]
        %v1750 = vld [vmem:[%s655] sm:$0xff]
        %1752 = vset.pattern.permute.xlu0 0
        %1753 = vperm.xlu0 %1752, %v1750
        %v1754 = vpop.permute.xlu0 %1753
        %v1757 = vsel %vm1067, %v1749, 0
        %1759 = vmatprep.subr.mxu0 0.0
        %1760 = vmatpush1.msra.mxu0 %v1747
        %1761 = vmatprep.subr.mxu0 0.0
        %1762 = vmatpush1.msra.mxu0 %v1748
        %1763 = vmatprep.subr.mxu0 0.0
        %1764 = vmatpush1.msra.mxu0 0.0
        %1765 = vmatprep.subr.mxu0 0.0
        %1766 = vmatpush1.msra.mxu0 0.0
        %1767 = vmatprep.subr.mxu0 0.0
        %1768 = vmatpush1.msra.mxu0 0.0
        %1769 = vmatprep.subr.mxu0 0.0
        %1770 = vmatpush1.msra.mxu0 0.0
        %1771 = vmatprep.subr.mxu0 0.0
        %1772 = vmatpush1.msra.mxu0 0.0
        %1773 = vmatprep.subr.mxu0 0.0
        %1774 = vmatpush1.msra.mxu0 0.0
        %1775 = vmatprep.subr.mxu0 0.0
        %1776 = vmatpush1.msra.mxu0 0.0
        %1777 = vmatprep.subr.mxu0 0.0
        %1778 = vmatpush1.msra.mxu0 0.0
        %1779 = vmatprep.subr.mxu0 0.0
        %1780 = vmatpush1.msra.mxu0 0.0
        %1781 = vmatprep.subr.mxu0 0.0
        %1782 = vmatpush1.msra.mxu0 0.0
        %1783 = vmatprep.subr.mxu0 0.0
        %1784 = vmatpush1.msra.mxu0 0.0
        %1785 = vmatprep.subr.mxu0 0.0
        %1786 = vmatpush1.msra.mxu0 0.0
        %1787 = vmatprep.subr.mxu0 0.0
        %1788 = vmatpush1.msra.mxu0 0.0
        %1789 = vmatprep.subr.mxu0 0.0
        %1790 = vmatpush1.msra.mxu0 0.0
        %1791 = vmatprep.subr.mxu0 0.0
        %1792 = vmatpush1.msra.mxu0 0.0
        %1793 = vmatprep.subr.mxu0 0.0
        %1794 = vmatpush1.msra.mxu0 0.0
        %1795 = vmatprep.subr.mxu0 0.0
        %1796 = vmatpush1.msra.mxu0 0.0
        %1797 = vmatprep.subr.mxu0 0.0
        %1798 = vmatpush1.msra.mxu0 0.0
        %1799 = vmatprep.subr.mxu0 0.0
        %1800 = vmatpush1.msra.mxu0 0.0
        %1801 = vmatprep.subr.mxu0 0.0
        %1802 = vmatpush1.msra.mxu0 0.0
        %1803 = vmatprep.subr.mxu0 0.0
        %1804 = vmatpush1.msra.mxu0 0.0
        %1805 = vmatprep.subr.mxu0 0.0
        %1806 = vmatpush1.msra.mxu0 0.0
        %1807 = vmatprep.subr.mxu0 0.0
        %1808 = vmatpush1.msra.mxu0 0.0
        %1809 = vmatprep.subr.mxu0 0.0
        %1810 = vmatpush1.msra.mxu0 0.0
        %1811 = vmatprep.subr.mxu0 0.0
        %1812 = vmatpush1.msra.mxu0 0.0
        %1813 = vmatprep.subr.mxu0 0.0
        %1814 = vmatpush1.msra.mxu0 0.0
        %1815 = vmatprep.subr.mxu0 0.0
        %1816 = vmatpush1.msra.mxu0 0.0
        %1817 = vmatprep.subr.mxu0 0.0
        %1818 = vmatpush1.msra.mxu0 0.0
        %1819 = vmatprep.subr.mxu0 0.0
        %1820 = vmatpush1.msra.mxu0 0.0
        %1821 = vmatprep.subr.mxu0 0.0
        %1822 = vmatpush1.msra.mxu0 0.0
        %1823 = vmatprep.mubr.f32.mxu0 0.0
        %1824 = vmatmul.mubr.f32.gmra.mrb[0].mxu0 %v1757
        %v1825 = vpop.f32.mrb[0].mxu0
        %v1826 = vadd.f32 %v1754, %v1825
        %v1827 = vpop.f32.mrb[0].mxu0
        %1828 = vdwg.mxu0
        %v1829 = vmul.f32 %v1826, 1.442695
        %v1830 = vpow.pop %v1829
        %v1831 = vmul.f32 %v1830, %v756
        %v1833 = vrot.slane %v1831, 4
        %v1835 = vadd.f32 %v1826, %v1833
        %v1836 = vmul.f32 %v1835, %v754
        %v1838 = vrot.slane %v1836, 4
        %v1840 = vsel %vm778, %v756, %v1838
        %1841 = vst [vmem:[%s597] sm:$0xff] %v1840
        %v1842 = vld [vmem:[%s658] sm:$0x1]
        %v1843 = vmul.f32 %v1826, %v754
        %v1845 = vrot.slane %v1843, 4
        %v1847 = vsel %vm778, %v1845, 0.0
        %1848 = vadd.xlane.f32.xlu0 %v1847
        %v1849 = vpop.xlane.xlu0 %1848
        %v1850 = vrot.slane %v1849, 4
        %v1851 = vadd.f32 %v1849, %v1850
        %v1852 = vrot.slane %v1851, 2
        %v1853 = vadd.f32 %v1851, %v1852
        %v1854 = vrot.slane %v1853, 1
        %v1855 = vadd.f32 %v1853, %v1854
        %s1856 = vtos %v1855
        %v1857 = vstv %s1856
        %v1858 = vadd.f32 %v1842, %v1857
        %vm1859 = vcmask 0
        %1860 = vst.msk [vmem:[%s658] sm:$0x1] %vm1859, %v1858
        %s1861 = sand.u32 %s360, 1
        %s1862 = scalar_lea.sflag [#allocation3], %s1861
        %s1863 = sand.u32 %s360, 1
        %s1864 = smul.addr %s1863, 8
        %s1865 = scalar_lea.vmem [#allocation2], %s1864
        %p1866 = scmp.lt.s32.totalorder %s32, 1
        %s1867 = scalar_select %p1866, %s32, 1
        %s1868 = scalar_lea.vmem %s13, %s1867
        // Predicated region
        $region73: #{tpu_custom_call.1} parent=67 // pred_check
          %p1869 = pneg %p370
        $region74: #{tpu_custom_call.1} parent=67 // pred_check_branch
          %1871 = sbr.rel (%p1869) target = $region76
        $region75: #{tpu_custom_call.1} parent=67 // pred_region
          %s1873 = ssub.s32 128, 128
          %1874 = vsyncadd %s1862, %s1873
          %s1875 = smul.addr %s32, 128
          %s1876 = scalar_lea.hbm %s12, %s1875
          %s1878 = sshll.u32 %s1865, 4
          %s1879 = int_to_ptr.vmem [resolvable:$true] %s1878
          %1881 = dma.vmem_to_hbm [thread:$0]  %s1879, 128, %s1876, %s1862
        $region76: #{tpu_custom_call.1} parent=67 // pred_fallthru
          _
        // Predicated region
        $region77: #{tpu_custom_call.1} parent=67 // pred_check
          %p1882 = pneg %p396
        $region78: #{tpu_custom_call.1} parent=67 // pred_check_branch
          %1884 = sbr.rel (%p1882) target = $region80
        $region79: #{tpu_custom_call.1} parent=67 // pred_region
          _
        $region80: #{tpu_custom_call.1} parent=67 // pred_fallthru
          _
      $region68: #{tpu_custom_call.1} parent=5 // pred_fallthru
        _
      %p1885 = scmp.le.s32.totalorder 2, %s23
      // Predicated region
      $region81: #{tpu_custom_call.1} parent=5 // pred_check
        %p1886 = pneg %p1885
      $region82: #{tpu_custom_call.1} parent=5 // pred_check_branch
        %1888 = sbr.rel (%p1886) target = $region84
      $region83: #{tpu_custom_call.1} parent=5 // pred_region
        %s1889 = ssub.s32 %s23, 2
        // Predicated region
        $region85: #{tpu_custom_call.1} parent=83 // pred_check
          %p1890 = pneg %p376
        $region86: #{tpu_custom_call.1} parent=83 // pred_check_branch
          %1892 = sbr.rel (%p1890) target = $region88
        $region87: #{tpu_custom_call.1} parent=83 // pred_region
          %s1893 = sand.u32 %s361, 1
          %s1894 = scalar_lea.sflag [#allocation3], %s1893
          %s1895 = sand.u32 %s361, 1
          %s1896 = smul.addr %s1895, 8
          %s1897 = scalar_lea.vmem [#allocation2], %s1896
          %1898 = dma.done %s1894, 128
        $region88: #{tpu_custom_call.1} parent=83 // pred_fallthru
          _
        // Predicated region
        $region89: #{tpu_custom_call.1} parent=83 // pred_check
          %p1899 = pneg %p402
        $region90: #{tpu_custom_call.1} parent=83 // pred_check_branch
          %1901 = sbr.rel (%p1899) target = $region92
        $region91: #{tpu_custom_call.1} parent=83 // pred_region
          %p1902 = scmp.lt.s32.totalorder %s34, 1
          %s1903 = scalar_select %p1902, %s34, 1
          %s1904 = scalar_lea.vmem %s13, %s1903
        $region92: #{tpu_custom_call.1} parent=83 // pred_fallthru
          _
      $region84: #{tpu_custom_call.1} parent=5 // pred_fallthru
        _
    $region6: #{tpu_custom_call.1} parent=1 // loop_footer
      %s27 = sadd.s32 1, %s23
    $region7: #{tpu_custom_call.1} parent=1 // loop_footer_branch
      %22 = sbr.rel target = $region3
    $region8: #{tpu_custom_call.1} parent=1 // loop_exit
      _
    %1905 = vsyncpa [#allocation3], 1
    %s1906 = scalar_lea.sflag [#allocation3], 1
    %1907 = vsyncpa %s1906, 1

</llo_original>
